<compile_context>
chip_gen: v5e
topology: v5e:2x2
jax: 0.10.0
libtpu: 0.0.40
codegen_flags: <defaults>
</compile_context>

<pallas_src>
import functools
import math

import numpy as np
import jax
import jax.numpy as jnp
from jax import lax
from jax.experimental import pallas as pl
from jax.experimental.pallas import tpu as pltpu


# ----------------------------- init (FanInInitReLULayer) ----------------------

def _draw_conv(key, cin, cout, init_scale):
    # FanInInitReLULayer: rescale each output filter to L2 norm == init_scale; zero bias.
    w = jax.random.normal(key, (cout, cin, 3, 3), jnp.float32)
    nrm = jnp.sqrt(jnp.sum(w * w, axis=(1, 2, 3), keepdims=True))
    return np.asarray(w * (init_scale / nrm))


def _draw_dense(key, din, dout, init_scale):
    w = jax.random.normal(key, (dout, din), jnp.float32)
    nrm = jnp.sqrt(jnp.sum(w * w, axis=1, keepdims=True))
    return np.asarray(w * (init_scale / nrm))


def _pack_conv_band(k_oihw, width):
    """(Cout,Cin,3,3) torch conv weight -> (3, W*Cin, W*Cout) banded weights.

    The dx taps and cin are folded into a band along the lane axis; the 3 dy
    taps stay separate (they pair with the 3 row-rolled activations in-kernel).
    """
    cout, cin = k_oihw.shape[0], k_oihw.shape[1]
    wb = np.zeros((3, width * cin, width * cout), np.float32)
    for dy in range(3):
        for dx in range(3):
            tap = k_oihw[:, :, dy, dx].T                        # (cin, cout)
            for w in range(width):
                wp = w + dx - 1
                if 0 <= wp < width:
                    wb[dy, wp * cin:(wp + 1) * cin, w * cout:(w + 1) * cout] = tap
    return wb


def init_impala_params(key, inshape, chans, outsize, nblock):
    c_cur, h_cur, w_cur = inshape
    stack_cfg, conv_ws = [], []
    for outchan in chans:
        stack_scale = 1.0 / math.sqrt(len(chans))                # ImpalaCNN per-stack scale
        blk_scale = math.sqrt(stack_scale / math.sqrt(nblock))   # CnnBasicBlock s
        h_out, w_out = (h_cur + 1) // 2, (w_cur + 1) // 2
        key, kf = jax.random.split(key)
        conv_ws.append(_pack_conv_band(_draw_conv(kf, c_cur, outchan, 1.0), w_cur))
        for _ in range(nblock):
            key, k0, k1 = jax.random.split(key, 3)
            conv_ws.append(_pack_conv_band(_draw_conv(k0, outchan, outchan, blk_scale), w_out))
            conv_ws.append(_pack_conv_band(_draw_conv(k1, outchan, outchan, blk_scale), w_out))
        stack_cfg.append(dict(H=h_cur, W=w_cur, Cin=c_cur, Cout=outchan))
        c_cur, h_cur, w_cur = outchan, h_out, w_out

    # One bf16 slab for every banded conv weight (zero-padded to a common K/N),
    # one f32 slab for every conv bias (zero under FanInInit).
    kmax = max(wb.shape[1] for wb in conv_ws)
    nmax = max(wb.shape[2] for wb in conv_ws)
    wslab = np.zeros((len(conv_ws), 3, kmax, nmax), np.float32)
    for l, wb in enumerate(conv_ws):
        wslab[l, :, :wb.shape[1], :wb.shape[2]] = wb
    bslab = np.zeros((len(conv_ws), 1, nmax), np.float32)

    key, kd = jax.random.split(key)
    wd = _draw_dense(kd, c_cur * h_cur * w_cur, outsize, 1.4)    # torch layout (out, C*H*W)
    # Fold PyTorch's NCHW flatten permutation into the dense weight: rows ordered (h, w, c).
    wd_packed = np.transpose(wd.reshape(outsize, c_cur, h_cur, w_cur), (2, 3, 1, 0)) \
                  .reshape(h_cur * w_cur * c_cur, outsize)

    return dict(
        wconv=jnp.asarray(wslab, jnp.bfloat16),
        bconv=jnp.asarray(bslab, jnp.float32),
        wd=jnp.asarray(wd_packed, jnp.bfloat16),
        bd=jnp.zeros((1, outsize), jnp.float32),
        cfg=dict(stacks=stack_cfg, nblock=nblock,
                 out_hwc=(h_cur, w_cur, c_cur), outsize=outsize),
    )


# ----------------------------- pooling selectors (constants) ------------------

def _pool_selectors(cfg, batch):
    """0/1 stride-2 downsample selectors for maxpool(3,2,1), padded & stacked per stack."""
    dsels, ssels = [], []
    for st in cfg["stacks"]:
        h, w, c = st["H"], st["W"], st["Cout"]
        ho, wo = (h + 1) // 2, (w + 1) // 2
        d = np.zeros((batch * ho, batch * h), np.float32)      # out row b*ho+j <- in row b*h+2j
        for b in range(batch):
            for j in range(ho):
                d[b * ho + j, b * h + 2 * j] = 1.0
        s = np.zeros((w * c, wo * c), np.float32)              # out lane j*c+cc <- in lane 2j*c+cc
        eye = np.eye(c, dtype=np.float32)
        for j in range(wo):
            s[2 * j * c:(2 * j + 1) * c, j * c:(j + 1) * c] = eye
        dsels.append(d)
        ssels.append(s)
    dmo = max(d.shape[0] for d in dsels)
    dmi = max(d.shape[1] for d in dsels)
    smi = max(s.shape[0] for s in ssels)
    smo = max(s.shape[1] for s in ssels)
    dslab = np.zeros((len(dsels), dmo, dmi), np.float32)
    sslab = np.zeros((len(ssels), smi, smo), np.float32)
    for i, (d, s) in enumerate(zip(dsels, ssels)):
        dslab[i, :d.shape[0], :d.shape[1]] = d
        sslab[i, :s.shape[0], :s.shape[1]] = s
    return jnp.asarray(dslab, jnp.bfloat16), jnp.asarray(sslab, jnp.bfloat16)


# ----------------------------- fused trunk + dense kernel ---------------------

def _rows_equal_any(ri, positions):
    """(M,1) bool mask: row index equals any of the given static positions."""
    return functools.reduce(jnp.logical_or, [ri == p for p in positions])


def _make_kernel(cfg, batch):
    stacks, nblock = cfg["stacks"], cfg["nblock"]
    h_f, w_f, c_f = cfg["out_hwc"]
    outsize = cfg["outsize"]

    def conv3x3(x, wconv_ref, bconv_ref, lidx, kk, nn, top, bot):
        """3x3 'same' conv + bias on a resident (batch*H, W*Cin) f32 value.

        dy taps pair with sublane rolls of x (boundary rows masked to zero ==
        conv zero padding); dx/cin taps are pre-folded into the banded weights.
        """
        m = x.shape[0]
        xc = x.astype(jnp.bfloat16)
        xu = jnp.where(top, 0.0, pltpu.roll(x, shift=1, axis=0)).astype(jnp.bfloat16)      # row h-1
        xd = jnp.where(bot, 0.0, pltpu.roll(x, shift=m - 1, axis=0)).astype(jnp.bfloat16)  # row h+1
        acc = jnp.dot(xu, wconv_ref[lidx, 0, :kk, :nn], preferred_element_type=jnp.float32)
        acc = acc + jnp.dot(xc, wconv_ref[lidx, 1, :kk, :nn], preferred_element_type=jnp.float32)
        acc = acc + jnp.dot(xd, wconv_ref[lidx, 2, :kk, :nn], preferred_element_type=jnp.float32)
        return acc + bconv_ref[lidx, :, :nn]

    def maxpool(y, dsel_ref, ssel_ref, sidx, H, W, C, top, bot):
        """max_pool2d(k=3, s=2, p=1) on a post-ReLU (batch*H, W*C) f32 value.

        Neighborhood maxes via rolls + edge masks (missing taps -> 0, exact on
        non-negative input); stride-2 downsample = one bf16 0/1 matmul per axis.
        """
        m, wc = y.shape
        ho, wo = (H + 1) // 2, (W + 1) // 2
        mo = batch * ho
        yu = jnp.where(top, 0.0, pltpu.roll(y, shift=1, axis=0))
        yd = jnp.where(bot, 0.0, pltpu.roll(y, shift=m - 1, axis=0))
        rmax = jnp.maximum(y, jnp.maximum(yu, yd))
        rds = jnp.dot(dsel_ref[sidx, :mo, :m], rmax.astype(jnp.bfloat16),
                      preferred_element_type=jnp.float32)                   # rows 2j per image
        li = lax.broadcasted_iota(jnp.int32, (1, wc), 1)
        cu = jnp.where(li < C, 0.0, pltpu.roll(rds, shift=C, axis=1))              # col w-1
        cd = jnp.where(li >= (W - 1) * C, 0.0, pltpu.roll(rds, shift=wc - C, axis=1))  # col w+1
        cmax = jnp.maximum(rds, jnp.maximum(cu, cd))
        return jnp.dot(cmax.astype(jnp.bfloat16), ssel_ref[sidx, :wc, :wo * C],
                       preferred_element_type=jnp.float32)                   # cols 2j

    def kernel(x_ref, wconv_ref, bconv_ref, dsel_ref, ssel_ref, wd_ref, bd_ref, out_ref):
        x = x_ref[...]                                # (batch*H0, W0*C0) f32, stays VMEM-resident
        lidx = 0
        for sidx, st in enumerate(stacks):
            H, W, Cin, Cout = st["H"], st["W"], st["Cin"], st["Cout"]
            m = batch * H
            kk, nn = W * Cin, W * Cout
            ri = lax.broadcasted_iota(jnp.int32, (m, 1), 0)
            top = _rows_equal_any(ri, [b * H for b in range(batch)])
            bot = _rows_equal_any(ri, [b * H + H - 1 for b in range(batch)])
            # firstconv + ReLU, then maxpool(3, 2, 1)
            y = jnp.maximum(conv3x3(x, wconv_ref, bconv_ref, lidx, kk, nn, top, bot), 0.0)
            lidx += 1
            x = maxpool(y, dsel_ref, ssel_ref, sidx, H, W, Cout, top, bot)
            ho, wo = (H + 1) // 2, (W + 1) // 2
            mo = batch * ho
            kk2 = wo * Cout
            ri2 = lax.broadcasted_iota(jnp.int32, (mo, 1), 0)
            top2 = _rows_equal_any(ri2, [b * ho for b in range(batch)])
            bot2 = _rows_equal_any(ri2, [b * ho + ho - 1 for b in range(batch)])
            # residual blocks: x = x + relu(conv1(relu(conv0(x))))
            for _ in range(nblock):
                hmid = jnp.maximum(
                    conv3x3(x, wconv_ref, bconv_ref, lidx, kk2, kk2, top2, bot2), 0.0)
                lidx += 1
                x = x + jnp.maximum(
                    conv3x3(hmid, wconv_ref, bconv_ref, lidx, kk2, kk2, top2, bot2), 0.0)
                lidx += 1

        # Fused dense epilogue: relu(flatten_(h,w,c)(x) @ Wd + bd), no HBM round trip.
        mf, kf = batch * h_f, w_f * c_f
        xbf = x.astype(jnp.bfloat16)
        rr = lax.broadcasted_iota(jnp.int32, (mf, 1), 0)
        acc = jnp.zeros((mf, outsize), jnp.float32)
        for h in range(h_f):                           # per-row partials with the right Wd slice
            mask_h = _rows_equal_any(rr, [b * h_f + h for b in range(batch)])
            p = jnp.dot(xbf, wd_ref[h * kf:(h + 1) * kf, :],
                        preferred_element_type=jnp.float32)
            acc = acc + jnp.where(mask_h, p, 0.0)
        # Sum each image's h_f per-row partials with one tiny f32 matmul.
        ci = lax.broadcasted_iota(jnp.int32, (batch, mf), 1)
        bi = lax.broadcasted_iota(jnp.int32, (batch, mf), 0)
        bsel = jnp.where((ci >= bi * h_f) & (ci < (bi + 1) * h_f), 1.0, 0.0)
        out = jnp.dot(bsel, acc, preferred_element_type=jnp.float32) + bd_ref[...]
        out_ref[...] = jnp.maximum(out, 0.0)

    return kernel


# ----------------------------- forward ---------------------------------------

def impala_cnn_forward(x_nchw, params):
    n, c, h, w = x_nchw.shape
    cfg = params["cfg"]
    outsize = cfg["outsize"]
    # Only layout glue outside the kernel: NCHW -> (N*H, W*C), batch folded into rows.
    x2d = jnp.transpose(x_nchw, (0, 2, 3, 1)).reshape(n * h, w * c)
    dsel, ssel = _pool_selectors(cfg, n)               # tiny constant 0/1 selectors
    kernel = _make_kernel(cfg, n)

    def full(a):
        return pl.BlockSpec(a.shape, lambda i, nd=a.ndim: (0,) * nd)

    return pl.pallas_call(
        kernel,
        out_shape=jax.ShapeDtypeStruct((n, outsize), jnp.float32),
        grid=(1,),   # whole batch in one step: no serial per-image grid on single-TC chips
        in_specs=[full(x2d), full(params["wconv"]), full(params["bconv"]),
                  full(dsel), full(ssel), full(params["wd"]), full(params["bd"])],
        out_specs=pl.BlockSpec((n, outsize), lambda i: (0, 0)),
        compiler_params=pltpu.CompilerParams(
            dimension_semantics=("arbitrary",),
            vmem_limit_bytes=32 * 1024 * 1024,          # explicit budget; actual use << 1 MiB
        ),
    )(x2d, params["wconv"], params["bconv"], dsel, ssel, params["wd"], params["bd"])


if __name__ == "__main__":
    key = jax.random.PRNGKey(0)
    kx, kp = jax.random.split(key)

    inshape = (4, 16, 16)        # (C, H, W)
    chans = (8, 16)
    outsize = 32
    nblock = 1
    batch = 2

    x = jax.random.normal(kx, (batch, *inshape), jnp.float32)   # NCHW input
    params = init_impala_params(kp, inshape, chans, outsize, nblock)

    fwd = jax.jit(lambda inp: impala_cnn_forward(inp, params))
    out = fwd(x)
    jax.block_until_ready(out)

    assert out.shape == (batch, outsize), out.shape
    assert out.dtype == jnp.float32
    assert bool(jnp.all(jnp.isfinite(out)))
    print("KERNEL_OK")
</pallas_src>

<mosaic_0001>
module attributes {stable_mosaic.version = 11 : i64} {
  func.func @kernel(%arg0: i32, %arg1: memref<32x64xf32, #tpu.memory_space<vmem>>, %arg2: memref<6x3x64x128xbf16, #tpu.memory_space<vmem>>, %arg3: memref<6x1x128xf32, #tpu.memory_space<vmem>>, %arg4: memref<2x16x32xbf16, #tpu.memory_space<vmem>>, %arg5: memref<2x128x64xbf16, #tpu.memory_space<vmem>>, %arg6: memref<256x32xbf16, #tpu.memory_space<vmem>>, %arg7: memref<1x32xf32, #tpu.memory_space<vmem>>, %arg8: memref<2x32xf32, #tpu.memory_space<vmem>>) attributes {dimension_semantics = [#tpu.dimension_semantics<arbitrary>], iteration_bounds = array<i64: 1>, scalar_prefetch = 0 : i64, scratch_operands = 0 : i64, tpu.core_type = #tpu.core_type<tc>, window_params = [{pipeline_mode = #tpu.pipeline_mode<synchronous>, transform_indices = @transform_0, window_bounds = array<i64: 32, 64>}, {pipeline_mode = #tpu.pipeline_mode<synchronous>, transform_indices = @transform_1, window_bounds = array<i64: 6, 3, 64, 128>}, {pipeline_mode = #tpu.pipeline_mode<synchronous>, transform_indices = @transform_2, window_bounds = array<i64: 6, 1, 128>}, {pipeline_mode = #tpu.pipeline_mode<synchronous>, transform_indices = @transform_3, window_bounds = array<i64: 2, 16, 32>}, {pipeline_mode = #tpu.pipeline_mode<synchronous>, transform_indices = @transform_4, window_bounds = array<i64: 2, 128, 64>}, {pipeline_mode = #tpu.pipeline_mode<synchronous>, transform_indices = @transform_5, window_bounds = array<i64: 256, 32>}, {pipeline_mode = #tpu.pipeline_mode<synchronous>, transform_indices = @transform_6, window_bounds = array<i64: 1, 32>}, {pipeline_mode = #tpu.pipeline_mode<synchronous>, transform_indices = @transform_7, window_bounds = array<i64: 2, 32>}]} {
    %c0 = arith.constant 0 : index
    %c0_0 = arith.constant 0 : index
    %0 = vector.load %arg1[%c0, %c0_0] : memref<32x64xf32, #tpu.memory_space<vmem>>, vector<32x64xf32>
    %1 = tpu.iota {dimensions = array<i32: 0>} : vector<32x1xi32>
    %c0_i32 = arith.constant 0 : i32
    %2 = vector.broadcast %c0_i32 : i32 to vector<32x1xi32>
    %3 = arith.cmpi eq, %1, %2 : vector<32x1xi32>
    %c16_i32 = arith.constant 16 : i32
    %4 = vector.broadcast %c16_i32 : i32 to vector<32x1xi32>
    %5 = arith.cmpi eq, %1, %4 : vector<32x1xi32>
    %6 = arith.ori %3, %5 : vector<32x1xi1>
    %c15_i32 = arith.constant 15 : i32
    %7 = vector.broadcast %c15_i32 : i32 to vector<32x1xi32>
    %8 = arith.cmpi eq, %1, %7 : vector<32x1xi32>
    %c31_i32 = arith.constant 31 : i32
    %9 = vector.broadcast %c31_i32 : i32 to vector<32x1xi32>
    %10 = arith.cmpi eq, %1, %9 : vector<32x1xi32>
    %11 = arith.ori %8, %10 : vector<32x1xi1>
    %12 = arith.truncf %0 : vector<32x64xf32> to vector<32x64xbf16>
    %c1_i32 = arith.constant 1 : i32
    %13 = tpu.dynamic_rotate %0 by %c1_i32 dim 0 : vector<32x64xf32>, i32 -> vector<32x64xf32>
    %cst = arith.constant 0.000000e+00 : f32
    %14 = vector.shape_cast %6 : vector<32x1xi1> to vector<32x1xi1>
    %15 = vector.broadcast %14 : vector<32x1xi1> to vector<32x64xi1>
    %16 = vector.broadcast %cst : f32 to vector<32x64xf32>
    %17 = arith.select %15, %16, %13 : vector<32x64xi1>, vector<32x64xf32>
    %18 = arith.truncf %17 : vector<32x64xf32> to vector<32x64xbf16>
    %c31_i32_1 = arith.constant 31 : i32
    %19 = tpu.dynamic_rotate %0 by %c31_i32_1 dim 0 : vector<32x64xf32>, i32 -> vector<32x64xf32>
    %cst_2 = arith.constant 0.000000e+00 : f32
    %20 = vector.shape_cast %11 : vector<32x1xi1> to vector<32x1xi1>
    %21 = vector.broadcast %20 : vector<32x1xi1> to vector<32x64xi1>
    %22 = vector.broadcast %cst_2 : f32 to vector<32x64xf32>
    %23 = arith.select %21, %22, %19 : vector<32x64xi1>, vector<32x64xf32>
    %24 = arith.truncf %23 : vector<32x64xf32> to vector<32x64xbf16>
    %c0_3 = arith.constant 0 : index
    %c0_4 = arith.constant 0 : index
    %c0_5 = arith.constant 0 : index
    %c0_6 = arith.constant 0 : index
    %25 = vector.load %arg2[%c0_3, %c0_4, %c0_5, %c0_6] : memref<6x3x64x128xbf16, #tpu.memory_space<vmem>>, vector<1x1x64x128xbf16>
    %26 = vector.shape_cast %25 : vector<1x1x64x128xbf16> to vector<64x128xbf16>
    %cst_7 = arith.constant dense<0.000000e+00> : vector<32x128xf32>
    %27 = tpu.matmul %18, %26, %cst_7 {dimension_numbers = #tpu.dot_dimension_numbers<[1], [0], [0], [1], [0, 0, 1, 1], [], []>} : vector<32x64xbf16>, vector<64x128xbf16>, vector<32x128xf32> -> vector<32x128xf32>
    %c0_8 = arith.constant 0 : index
    %c1 = arith.constant 1 : index
    %c0_9 = arith.constant 0 : index
    %c0_10 = arith.constant 0 : index
    %28 = vector.load %arg2[%c0_8, %c1, %c0_9, %c0_10] : memref<6x3x64x128xbf16, #tpu.memory_space<vmem>>, vector<1x1x64x128xbf16>
    %29 = vector.shape_cast %28 : vector<1x1x64x128xbf16> to vector<64x128xbf16>
    %cst_11 = arith.constant dense<0.000000e+00> : vector<32x128xf32>
    %30 = tpu.matmul %12, %29, %cst_11 {dimension_numbers = #tpu.dot_dimension_numbers<[1], [0], [0], [1], [0, 0, 1, 1], [], []>} : vector<32x64xbf16>, vector<64x128xbf16>, vector<32x128xf32> -> vector<32x128xf32>
    %31 = arith.addf %27, %30 : vector<32x128xf32>
    %c0_12 = arith.constant 0 : index
    %c2 = arith.constant 2 : index
    %c0_13 = arith.constant 0 : index
    %c0_14 = arith.constant 0 : index
    %32 = vector.load %arg2[%c0_12, %c2, %c0_13, %c0_14] : memref<6x3x64x128xbf16, #tpu.memory_space<vmem>>, vector<1x1x64x128xbf16>
    %33 = vector.shape_cast %32 : vector<1x1x64x128xbf16> to vector<64x128xbf16>
    %cst_15 = arith.constant dense<0.000000e+00> : vector<32x128xf32>
    %34 = tpu.matmul %24, %33, %cst_15 {dimension_numbers = #tpu.dot_dimension_numbers<[1], [0], [0], [1], [0, 0, 1, 1], [], []>} : vector<32x64xbf16>, vector<64x128xbf16>, vector<32x128xf32> -> vector<32x128xf32>
    %35 = arith.addf %31, %34 : vector<32x128xf32>
    %c0_16 = arith.constant 0 : index
    %c0_17 = arith.constant 0 : index
    %c0_18 = arith.constant 0 : index
    %36 = vector.load %arg3[%c0_16, %c0_17, %c0_18] : memref<6x1x128xf32, #tpu.memory_space<vmem>>, vector<1x1x128xf32>
    %37 = vector.shape_cast %36 : vector<1x1x128xf32> to vector<1x128xf32>
    %38 = vector.broadcast %37 : vector<1x128xf32> to vector<32x128xf32>
    %39 = arith.addf %35, %38 : vector<32x128xf32>
    %cst_19 = arith.constant 0.000000e+00 : f32
    %40 = vector.broadcast %cst_19 : f32 to vector<32x128xf32>
    %41 = arith.maximumf %39, %40 : vector<32x128xf32>
    %c1_i32_20 = arith.constant 1 : i32
    %42 = tpu.dynamic_rotate %41 by %c1_i32_20 dim 0 : vector<32x128xf32>, i32 -> vector<32x128xf32>
    %cst_21 = arith.constant 0.000000e+00 : f32
    %43 = vector.shape_cast %6 : vector<32x1xi1> to vector<32x1xi1>
    %44 = vector.broadcast %43 : vector<32x1xi1> to vector<32x128xi1>
    %45 = vector.broadcast %cst_21 : f32 to vector<32x128xf32>
    %46 = arith.select %44, %45, %42 : vector<32x128xi1>, vector<32x128xf32>
    %c31_i32_22 = arith.constant 31 : i32
    %47 = tpu.dynamic_rotate %41 by %c31_i32_22 dim 0 : vector<32x128xf32>, i32 -> vector<32x128xf32>
    %cst_23 = arith.constant 0.000000e+00 : f32
    %48 = vector.shape_cast %11 : vector<32x1xi1> to vector<32x1xi1>
    %49 = vector.broadcast %48 : vector<32x1xi1> to vector<32x128xi1>
    %50 = vector.broadcast %cst_23 : f32 to vector<32x128xf32>
    %51 = arith.select %49, %50, %47 : vector<32x128xi1>, vector<32x128xf32>
    %52 = arith.maximumf %46, %51 : vector<32x128xf32>
    %53 = arith.maximumf %41, %52 : vector<32x128xf32>
    %c0_24 = arith.constant 0 : index
    %c0_25 = arith.constant 0 : index
    %c0_26 = arith.constant 0 : index
    %54 = vector.load %arg4[%c0_24, %c0_25, %c0_26] : memref<2x16x32xbf16, #tpu.memory_space<vmem>>, vector<1x16x32xbf16>
    %55 = vector.shape_cast %54 : vector<1x16x32xbf16> to vector<16x32xbf16>
    %56 = arith.truncf %53 : vector<32x128xf32> to vector<32x128xbf16>
    %cst_27 = arith.constant dense<0.000000e+00> : vector<16x128xf32>
    %57 = tpu.matmul %55, %56, %cst_27 {dimension_numbers = #tpu.dot_dimension_numbers<[1], [0], [0], [1], [0, 0, 1, 1], [], []>} : vector<16x32xbf16>, vector<32x128xbf16>, vector<16x128xf32> -> vector<16x128xf32>
    %58 = tpu.iota {dimensions = array<i32: 1>} : vector<1x128xi32>
    %c8_i32 = arith.constant 8 : i32
    %59 = vector.broadcast %c8_i32 : i32 to vector<1x128xi32>
    %60 = arith.cmpi slt, %58, %59 : vector<1x128xi32>
    %c8_i32_28 = arith.constant 8 : i32
    %61 = tpu.dynamic_rotate %57 by %c8_i32_28 dim 1 : vector<16x128xf32>, i32 -> vector<16x128xf32>
    %cst_29 = arith.constant 0.000000e+00 : f32
    %62 = vector.shape_cast %60 : vector<1x128xi1> to vector<1x128xi1>
    %63 = vector.broadcast %62 : vector<1x128xi1> to vector<16x128xi1>
    %64 = vector.broadcast %cst_29 : f32 to vector<16x128xf32>
    %65 = arith.select %63, %64, %61 : vector<16x128xi1>, vector<16x128xf32>
    %c120_i32 = arith.constant 120 : i32
    %66 = vector.broadcast %c120_i32 : i32 to vector<1x128xi32>
    %67 = arith.cmpi sge, %58, %66 : vector<1x128xi32>
    %c120_i32_30 = arith.constant 120 : i32
    %68 = tpu.dynamic_rotate %57 by %c120_i32_30 dim 1 : vector<16x128xf32>, i32 -> vector<16x128xf32>
    %cst_31 = arith.constant 0.000000e+00 : f32
    %69 = vector.shape_cast %67 : vector<1x128xi1> to vector<1x128xi1>
    %70 = vector.broadcast %69 : vector<1x128xi1> to vector<16x128xi1>
    %71 = vector.broadcast %cst_31 : f32 to vector<16x128xf32>
    %72 = arith.select %70, %71, %68 : vector<16x128xi1>, vector<16x128xf32>
    %73 = arith.maximumf %65, %72 : vector<16x128xf32>
    %74 = arith.maximumf %57, %73 : vector<16x128xf32>
    %75 = arith.truncf %74 : vector<16x128xf32> to vector<16x128xbf16>
    %c0_32 = arith.constant 0 : index
    %c0_33 = arith.constant 0 : index
    %c0_34 = arith.constant 0 : index
    %76 = vector.load %arg5[%c0_32, %c0_33, %c0_34] : memref<2x128x64xbf16, #tpu.memory_space<vmem>>, vector<1x128x64xbf16>
    %77 = vector.shape_cast %76 : vector<1x128x64xbf16> to vector<128x64xbf16>
    %cst_35 = arith.constant dense<0.000000e+00> : vector<16x64xf32>
    %78 = tpu.matmul %75, %77, %cst_35 {dimension_numbers = #tpu.dot_dimension_numbers<[1], [0], [0], [1], [0, 0, 1, 1], [], []>} : vector<16x128xbf16>, vector<128x64xbf16>, vector<16x64xf32> -> vector<16x64xf32>
    %79 = tpu.iota {dimensions = array<i32: 0>} : vector<16x1xi32>
    %c0_i32_36 = arith.constant 0 : i32
    %80 = vector.broadcast %c0_i32_36 : i32 to vector<16x1xi32>
    %81 = arith.cmpi eq, %79, %80 : vector<16x1xi32>
    %c8_i32_37 = arith.constant 8 : i32
    %82 = vector.broadcast %c8_i32_37 : i32 to vector<16x1xi32>
    %83 = arith.cmpi eq, %79, %82 : vector<16x1xi32>
    %84 = arith.ori %81, %83 : vector<16x1xi1>
    %c7_i32 = arith.constant 7 : i32
    %85 = vector.broadcast %c7_i32 : i32 to vector<16x1xi32>
    %86 = arith.cmpi eq, %79, %85 : vector<16x1xi32>
    %c15_i32_38 = arith.constant 15 : i32
    %87 = vector.broadcast %c15_i32_38 : i32 to vector<16x1xi32>
    %88 = arith.cmpi eq, %79, %87 : vector<16x1xi32>
    %89 = arith.ori %86, %88 : vector<16x1xi1>
    %90 = arith.truncf %78 : vector<16x64xf32> to vector<16x64xbf16>
    %c1_i32_39 = arith.constant 1 : i32
    %91 = tpu.dynamic_rotate %78 by %c1_i32_39 dim 0 : vector<16x64xf32>, i32 -> vector<16x64xf32>
    %cst_40 = arith.constant 0.000000e+00 : f32
    %92 = vector.shape_cast %84 : vector<16x1xi1> to vector<16x1xi1>
    %93 = vector.broadcast %92 : vector<16x1xi1> to vector<16x64xi1>
    %94 = vector.broadcast %cst_40 : f32 to vector<16x64xf32>
    %95 = arith.select %93, %94, %91 : vector<16x64xi1>, vector<16x64xf32>
    %96 = arith.truncf %95 : vector<16x64xf32> to vector<16x64xbf16>
    %c15_i32_41 = arith.constant 15 : i32
    %97 = tpu.dynamic_rotate %78 by %c15_i32_41 dim 0 : vector<16x64xf32>, i32 -> vector<16x64xf32>
    %cst_42 = arith.constant 0.000000e+00 : f32
    %98 = vector.shape_cast %89 : vector<16x1xi1> to vector<16x1xi1>
    %99 = vector.broadcast %98 : vector<16x1xi1> to vector<16x64xi1>
    %100 = vector.broadcast %cst_42 : f32 to vector<16x64xf32>
    %101 = arith.select %99, %100, %97 : vector<16x64xi1>, vector<16x64xf32>
    %102 = arith.truncf %101 : vector<16x64xf32> to vector<16x64xbf16>
    %c1_43 = arith.constant 1 : index
    %c0_44 = arith.constant 0 : index
    %c0_45 = arith.constant 0 : index
    %c0_46 = arith.constant 0 : index
    %103 = vector.load %arg2[%c1_43, %c0_44, %c0_45, %c0_46] : memref<6x3x64x128xbf16, #tpu.memory_space<vmem>>, vector<1x1x64x64xbf16>
    %104 = vector.shape_cast %103 : vector<1x1x64x64xbf16> to vector<64x64xbf16>
    %cst_47 = arith.constant dense<0.000000e+00> : vector<16x64xf32>
    %105 = tpu.matmul %96, %104, %cst_47 {dimension_numbers = #tpu.dot_dimension_numbers<[1], [0], [0], [1], [0, 0, 1, 1], [], []>} : vector<16x64xbf16>, vector<64x64xbf16>, vector<16x64xf32> -> vector<16x64xf32>
    %c1_48 = arith.constant 1 : index
    %c1_49 = arith.constant 1 : index
    %c0_50 = arith.constant 0 : index
    %c0_51 = arith.constant 0 : index
    %106 = vector.load %arg2[%c1_48, %c1_49, %c0_50, %c0_51] : memref<6x3x64x128xbf16, #tpu.memory_space<vmem>>, vector<1x1x64x64xbf16>
    %107 = vector.shape_cast %106 : vector<1x1x64x64xbf16> to vector<64x64xbf16>
    %cst_52 = arith.constant dense<0.000000e+00> : vector<16x64xf32>
    %108 = tpu.matmul %90, %107, %cst_52 {dimension_numbers = #tpu.dot_dimension_numbers<[1], [0], [0], [1], [0, 0, 1, 1], [], []>} : vector<16x64xbf16>, vector<64x64xbf16>, vector<16x64xf32> -> vector<16x64xf32>
    %109 = arith.addf %105, %108 : vector<16x64xf32>
    %c1_53 = arith.constant 1 : index
    %c2_54 = arith.constant 2 : index
    %c0_55 = arith.constant 0 : index
    %c0_56 = arith.constant 0 : index
    %110 = vector.load %arg2[%c1_53, %c2_54, %c0_55, %c0_56] : memref<6x3x64x128xbf16, #tpu.memory_space<vmem>>, vector<1x1x64x64xbf16>
    %111 = vector.shape_cast %110 : vector<1x1x64x64xbf16> to vector<64x64xbf16>
    %cst_57 = arith.constant dense<0.000000e+00> : vector<16x64xf32>
    %112 = tpu.matmul %102, %111, %cst_57 {dimension_numbers = #tpu.dot_dimension_numbers<[1], [0], [0], [1], [0, 0, 1, 1], [], []>} : vector<16x64xbf16>, vector<64x64xbf16>, vector<16x64xf32> -> vector<16x64xf32>
    %113 = arith.addf %109, %112 : vector<16x64xf32>
    %c1_58 = arith.constant 1 : index
    %c0_59 = arith.constant 0 : index
    %c0_60 = arith.constant 0 : index
    %114 = vector.load %arg3[%c1_58, %c0_59, %c0_60] : memref<6x1x128xf32, #tpu.memory_space<vmem>>, vector<1x1x64xf32>
    %115 = vector.shape_cast %114 : vector<1x1x64xf32> to vector<1x64xf32>
    %116 = vector.broadcast %115 : vector<1x64xf32> to vector<16x64xf32>
    %117 = arith.addf %113, %116 : vector<16x64xf32>
    %cst_61 = arith.constant 0.000000e+00 : f32
    %118 = vector.broadcast %cst_61 : f32 to vector<16x64xf32>
    %119 = arith.maximumf %117, %118 : vector<16x64xf32>
    %120 = arith.truncf %119 : vector<16x64xf32> to vector<16x64xbf16>
    %c1_i32_62 = arith.constant 1 : i32
    %121 = tpu.dynamic_rotate %119 by %c1_i32_62 dim 0 : vector<16x64xf32>, i32 -> vector<16x64xf32>
    %cst_63 = arith.constant 0.000000e+00 : f32
    %122 = vector.shape_cast %84 : vector<16x1xi1> to vector<16x1xi1>
    %123 = vector.broadcast %122 : vector<16x1xi1> to vector<16x64xi1>
    %124 = vector.broadcast %cst_63 : f32 to vector<16x64xf32>
    %125 = arith.select %123, %124, %121 : vector<16x64xi1>, vector<16x64xf32>
    %126 = arith.truncf %125 : vector<16x64xf32> to vector<16x64xbf16>
    %c15_i32_64 = arith.constant 15 : i32
    %127 = tpu.dynamic_rotate %119 by %c15_i32_64 dim 0 : vector<16x64xf32>, i32 -> vector<16x64xf32>
    %cst_65 = arith.constant 0.000000e+00 : f32
    %128 = vector.shape_cast %89 : vector<16x1xi1> to vector<16x1xi1>
    %129 = vector.broadcast %128 : vector<16x1xi1> to vector<16x64xi1>
    %130 = vector.broadcast %cst_65 : f32 to vector<16x64xf32>
    %131 = arith.select %129, %130, %127 : vector<16x64xi1>, vector<16x64xf32>
    %132 = arith.truncf %131 : vector<16x64xf32> to vector<16x64xbf16>
    %c2_66 = arith.constant 2 : index
    %c0_67 = arith.constant 0 : index
    %c0_68 = arith.constant 0 : index
    %c0_69 = arith.constant 0 : index
    %133 = vector.load %arg2[%c2_66, %c0_67, %c0_68, %c0_69] : memref<6x3x64x128xbf16, #tpu.memory_space<vmem>>, vector<1x1x64x64xbf16>
    %134 = vector.shape_cast %133 : vector<1x1x64x64xbf16> to vector<64x64xbf16>
    %cst_70 = arith.constant dense<0.000000e+00> : vector<16x64xf32>
    %135 = tpu.matmul %126, %134, %cst_70 {dimension_numbers = #tpu.dot_dimension_numbers<[1], [0], [0], [1], [0, 0, 1, 1], [], []>} : vector<16x64xbf16>, vector<64x64xbf16>, vector<16x64xf32> -> vector<16x64xf32>
    %c2_71 = arith.constant 2 : index
    %c1_72 = arith.constant 1 : index
    %c0_73 = arith.constant 0 : index
    %c0_74 = arith.constant 0 : index
    %136 = vector.load %arg2[%c2_71, %c1_72, %c0_73, %c0_74] : memref<6x3x64x128xbf16, #tpu.memory_space<vmem>>, vector<1x1x64x64xbf16>
    %137 = vector.shape_cast %136 : vector<1x1x64x64xbf16> to vector<64x64xbf16>
    %cst_75 = arith.constant dense<0.000000e+00> : vector<16x64xf32>
    %138 = tpu.matmul %120, %137, %cst_75 {dimension_numbers = #tpu.dot_dimension_numbers<[1], [0], [0], [1], [0, 0, 1, 1], [], []>} : vector<16x64xbf16>, vector<64x64xbf16>, vector<16x64xf32> -> vector<16x64xf32>
    %139 = arith.addf %135, %138 : vector<16x64xf32>
    %c2_76 = arith.constant 2 : index
    %c2_77 = arith.constant 2 : index
    %c0_78 = arith.constant 0 : index
    %c0_79 = arith.constant 0 : index
    %140 = vector.load %arg2[%c2_76, %c2_77, %c0_78, %c0_79] : memref<6x3x64x128xbf16, #tpu.memory_space<vmem>>, vector<1x1x64x64xbf16>
    %141 = vector.shape_cast %140 : vector<1x1x64x64xbf16> to vector<64x64xbf16>
    %cst_80 = arith.constant dense<0.000000e+00> : vector<16x64xf32>
    %142 = tpu.matmul %132, %141, %cst_80 {dimension_numbers = #tpu.dot_dimension_numbers<[1], [0], [0], [1], [0, 0, 1, 1], [], []>} : vector<16x64xbf16>, vector<64x64xbf16>, vector<16x64xf32> -> vector<16x64xf32>
    %143 = arith.addf %139, %142 : vector<16x64xf32>
    %c2_81 = arith.constant 2 : index
    %c0_82 = arith.constant 0 : index
    %c0_83 = arith.constant 0 : index
    %144 = vector.load %arg3[%c2_81, %c0_82, %c0_83] : memref<6x1x128xf32, #tpu.memory_space<vmem>>, vector<1x1x64xf32>
    %145 = vector.shape_cast %144 : vector<1x1x64xf32> to vector<1x64xf32>
    %146 = vector.broadcast %145 : vector<1x64xf32> to vector<16x64xf32>
    %147 = arith.addf %143, %146 : vector<16x64xf32>
    %cst_84 = arith.constant 0.000000e+00 : f32
    %148 = vector.broadcast %cst_84 : f32 to vector<16x64xf32>
    %149 = arith.maximumf %147, %148 : vector<16x64xf32>
    %150 = arith.addf %78, %149 : vector<16x64xf32>
    %151 = tpu.iota {dimensions = array<i32: 0>} : vector<16x1xi32>
    %c0_i32_85 = arith.constant 0 : i32
    %152 = vector.broadcast %c0_i32_85 : i32 to vector<16x1xi32>
    %153 = arith.cmpi eq, %151, %152 : vector<16x1xi32>
    %c8_i32_86 = arith.constant 8 : i32
    %154 = vector.broadcast %c8_i32_86 : i32 to vector<16x1xi32>
    %155 = arith.cmpi eq, %151, %154 : vector<16x1xi32>
    %156 = arith.ori %153, %155 : vector<16x1xi1>
    %c7_i32_87 = arith.constant 7 : i32
    %157 = vector.broadcast %c7_i32_87 : i32 to vector<16x1xi32>
    %158 = arith.cmpi eq, %151, %157 : vector<16x1xi32>
    %c15_i32_88 = arith.constant 15 : i32
    %159 = vector.broadcast %c15_i32_88 : i32 to vector<16x1xi32>
    %160 = arith.cmpi eq, %151, %159 : vector<16x1xi32>
    %161 = arith.ori %158, %160 : vector<16x1xi1>
    %162 = arith.truncf %150 : vector<16x64xf32> to vector<16x64xbf16>
    %c1_i32_89 = arith.constant 1 : i32
    %163 = tpu.dynamic_rotate %150 by %c1_i32_89 dim 0 : vector<16x64xf32>, i32 -> vector<16x64xf32>
    %cst_90 = arith.constant 0.000000e+00 : f32
    %164 = vector.shape_cast %156 : vector<16x1xi1> to vector<16x1xi1>
    %165 = vector.broadcast %164 : vector<16x1xi1> to vector<16x64xi1>
    %166 = vector.broadcast %cst_90 : f32 to vector<16x64xf32>
    %167 = arith.select %165, %166, %163 : vector<16x64xi1>, vector<16x64xf32>
    %168 = arith.truncf %167 : vector<16x64xf32> to vector<16x64xbf16>
    %c15_i32_91 = arith.constant 15 : i32
    %169 = tpu.dynamic_rotate %150 by %c15_i32_91 dim 0 : vector<16x64xf32>, i32 -> vector<16x64xf32>
    %cst_92 = arith.constant 0.000000e+00 : f32
    %170 = vector.shape_cast %161 : vector<16x1xi1> to vector<16x1xi1>
    %171 = vector.broadcast %170 : vector<16x1xi1> to vector<16x64xi1>
    %172 = vector.broadcast %cst_92 : f32 to vector<16x64xf32>
    %173 = arith.select %171, %172, %169 : vector<16x64xi1>, vector<16x64xf32>
    %174 = arith.truncf %173 : vector<16x64xf32> to vector<16x64xbf16>
    %c3 = arith.constant 3 : index
    %c0_93 = arith.constant 0 : index
    %c0_94 = arith.constant 0 : index
    %c0_95 = arith.constant 0 : index
    %175 = vector.load %arg2[%c3, %c0_93, %c0_94, %c0_95] : memref<6x3x64x128xbf16, #tpu.memory_space<vmem>>, vector<1x1x64x128xbf16>
    %176 = vector.shape_cast %175 : vector<1x1x64x128xbf16> to vector<64x128xbf16>
    %cst_96 = arith.constant dense<0.000000e+00> : vector<16x128xf32>
    %177 = tpu.matmul %168, %176, %cst_96 {dimension_numbers = #tpu.dot_dimension_numbers<[1], [0], [0], [1], [0, 0, 1, 1], [], []>} : vector<16x64xbf16>, vector<64x128xbf16>, vector<16x128xf32> -> vector<16x128xf32>
    %c3_97 = arith.constant 3 : index
    %c1_98 = arith.constant 1 : index
    %c0_99 = arith.constant 0 : index
    %c0_100 = arith.constant 0 : index
    %178 = vector.load %arg2[%c3_97, %c1_98, %c0_99, %c0_100] : memref<6x3x64x128xbf16, #tpu.memory_space<vmem>>, vector<1x1x64x128xbf16>
    %179 = vector.shape_cast %178 : vector<1x1x64x128xbf16> to vector<64x128xbf16>
    %cst_101 = arith.constant dense<0.000000e+00> : vector<16x128xf32>
    %180 = tpu.matmul %162, %179, %cst_101 {dimension_numbers = #tpu.dot_dimension_numbers<[1], [0], [0], [1], [0, 0, 1, 1], [], []>} : vector<16x64xbf16>, vector<64x128xbf16>, vector<16x128xf32> -> vector<16x128xf32>
    %181 = arith.addf %177, %180 : vector<16x128xf32>
    %c3_102 = arith.constant 3 : index
    %c2_103 = arith.constant 2 : index
    %c0_104 = arith.constant 0 : index
    %c0_105 = arith.constant 0 : index
    %182 = vector.load %arg2[%c3_102, %c2_103, %c0_104, %c0_105] : memref<6x3x64x128xbf16, #tpu.memory_space<vmem>>, vector<1x1x64x128xbf16>
    %183 = vector.shape_cast %182 : vector<1x1x64x128xbf16> to vector<64x128xbf16>
    %cst_106 = arith.constant dense<0.000000e+00> : vector<16x128xf32>
    %184 = tpu.matmul %174, %183, %cst_106 {dimension_numbers = #tpu.dot_dimension_numbers<[1], [0], [0], [1], [0, 0, 1, 1], [], []>} : vector<16x64xbf16>, vector<64x128xbf16>, vector<16x128xf32> -> vector<16x128xf32>
    %185 = arith.addf %181, %184 : vector<16x128xf32>
    %c3_107 = arith.constant 3 : index
    %c0_108 = arith.constant 0 : index
    %c0_109 = arith.constant 0 : index
    %186 = vector.load %arg3[%c3_107, %c0_108, %c0_109] : memref<6x1x128xf32, #tpu.memory_space<vmem>>, vector<1x1x128xf32>
    %187 = vector.shape_cast %186 : vector<1x1x128xf32> to vector<1x128xf32>
    %188 = vector.broadcast %187 : vector<1x128xf32> to vector<16x128xf32>
    %189 = arith.addf %185, %188 : vector<16x128xf32>
    %cst_110 = arith.constant 0.000000e+00 : f32
    %190 = vector.broadcast %cst_110 : f32 to vector<16x128xf32>
    %191 = arith.maximumf %189, %190 : vector<16x128xf32>
    %c1_i32_111 = arith.constant 1 : i32
    %192 = tpu.dynamic_rotate %191 by %c1_i32_111 dim 0 : vector<16x128xf32>, i32 -> vector<16x128xf32>
    %cst_112 = arith.constant 0.000000e+00 : f32
    %193 = vector.shape_cast %156 : vector<16x1xi1> to vector<16x1xi1>
    %194 = vector.broadcast %193 : vector<16x1xi1> to vector<16x128xi1>
    %195 = vector.broadcast %cst_112 : f32 to vector<16x128xf32>
    %196 = arith.select %194, %195, %192 : vector<16x128xi1>, vector<16x128xf32>
    %c15_i32_113 = arith.constant 15 : i32
    %197 = tpu.dynamic_rotate %191 by %c15_i32_113 dim 0 : vector<16x128xf32>, i32 -> vector<16x128xf32>
    %cst_114 = arith.constant 0.000000e+00 : f32
    %198 = vector.shape_cast %161 : vector<16x1xi1> to vector<16x1xi1>
    %199 = vector.broadcast %198 : vector<16x1xi1> to vector<16x128xi1>
    %200 = vector.broadcast %cst_114 : f32 to vector<16x128xf32>
    %201 = arith.select %199, %200, %197 : vector<16x128xi1>, vector<16x128xf32>
    %202 = arith.maximumf %196, %201 : vector<16x128xf32>
    %203 = arith.maximumf %191, %202 : vector<16x128xf32>
    %c1_115 = arith.constant 1 : index
    %c0_116 = arith.constant 0 : index
    %c0_117 = arith.constant 0 : index
    %204 = vector.load %arg4[%c1_115, %c0_116, %c0_117] : memref<2x16x32xbf16, #tpu.memory_space<vmem>>, vector<1x8x16xbf16>
    %205 = vector.shape_cast %204 : vector<1x8x16xbf16> to vector<8x16xbf16>
    %206 = arith.truncf %203 : vector<16x128xf32> to vector<16x128xbf16>
    %cst_118 = arith.constant dense<0.000000e+00> : vector<8x128xf32>
    %207 = tpu.matmul %205, %206, %cst_118 {dimension_numbers = #tpu.dot_dimension_numbers<[1], [0], [0], [1], [0, 0, 1, 1], [], []>} : vector<8x16xbf16>, vector<16x128xbf16>, vector<8x128xf32> -> vector<8x128xf32>
    %208 = tpu.iota {dimensions = array<i32: 1>} : vector<1x128xi32>
    %c16_i32_119 = arith.constant 16 : i32
    %209 = vector.broadcast %c16_i32_119 : i32 to vector<1x128xi32>
    %210 = arith.cmpi slt, %208, %209 : vector<1x128xi32>
    %c16_i32_120 = arith.constant 16 : i32
    %211 = tpu.dynamic_rotate %207 by %c16_i32_120 dim 1 : vector<8x128xf32>, i32 -> vector<8x128xf32>
    %cst_121 = arith.constant 0.000000e+00 : f32
    %212 = vector.shape_cast %210 : vector<1x128xi1> to vector<1x128xi1>
    %213 = vector.broadcast %212 : vector<1x128xi1> to vector<8x128xi1>
    %214 = vector.broadcast %cst_121 : f32 to vector<8x128xf32>
    %215 = arith.select %213, %214, %211 : vector<8x128xi1>, vector<8x128xf32>
    %c112_i32 = arith.constant 112 : i32
    %216 = vector.broadcast %c112_i32 : i32 to vector<1x128xi32>
    %217 = arith.cmpi sge, %208, %216 : vector<1x128xi32>
    %c112_i32_122 = arith.constant 112 : i32
    %218 = tpu.dynamic_rotate %207 by %c112_i32_122 dim 1 : vector<8x128xf32>, i32 -> vector<8x128xf32>
    %cst_123 = arith.constant 0.000000e+00 : f32
    %219 = vector.shape_cast %217 : vector<1x128xi1> to vector<1x128xi1>
    %220 = vector.broadcast %219 : vector<1x128xi1> to vector<8x128xi1>
    %221 = vector.broadcast %cst_123 : f32 to vector<8x128xf32>
    %222 = arith.select %220, %221, %218 : vector<8x128xi1>, vector<8x128xf32>
    %223 = arith.maximumf %215, %222 : vector<8x128xf32>
    %224 = arith.maximumf %207, %223 : vector<8x128xf32>
    %225 = arith.truncf %224 : vector<8x128xf32> to vector<8x128xbf16>
    %c1_124 = arith.constant 1 : index
    %c0_125 = arith.constant 0 : index
    %c0_126 = arith.constant 0 : index
    %226 = vector.load %arg5[%c1_124, %c0_125, %c0_126] : memref<2x128x64xbf16, #tpu.memory_space<vmem>>, vector<1x128x64xbf16>
    %227 = vector.shape_cast %226 : vector<1x128x64xbf16> to vector<128x64xbf16>
    %cst_127 = arith.constant dense<0.000000e+00> : vector<8x64xf32>
    %228 = tpu.matmul %225, %227, %cst_127 {dimension_numbers = #tpu.dot_dimension_numbers<[1], [0], [0], [1], [0, 0, 1, 1], [], []>} : vector<8x128xbf16>, vector<128x64xbf16>, vector<8x64xf32> -> vector<8x64xf32>
    %229 = tpu.iota {dimensions = array<i32: 0>} : vector<8x1xi32>
    %c0_i32_128 = arith.constant 0 : i32
    %230 = vector.broadcast %c0_i32_128 : i32 to vector<8x1xi32>
    %231 = arith.cmpi eq, %229, %230 : vector<8x1xi32>
    %c4_i32 = arith.constant 4 : i32
    %232 = vector.broadcast %c4_i32 : i32 to vector<8x1xi32>
    %233 = arith.cmpi eq, %229, %232 : vector<8x1xi32>
    %234 = arith.ori %231, %233 : vector<8x1xi1>
    %c3_i32 = arith.constant 3 : i32
    %235 = vector.broadcast %c3_i32 : i32 to vector<8x1xi32>
    %236 = arith.cmpi eq, %229, %235 : vector<8x1xi32>
    %c7_i32_129 = arith.constant 7 : i32
    %237 = vector.broadcast %c7_i32_129 : i32 to vector<8x1xi32>
    %238 = arith.cmpi eq, %229, %237 : vector<8x1xi32>
    %239 = arith.ori %236, %238 : vector<8x1xi1>
    %240 = arith.truncf %228 : vector<8x64xf32> to vector<8x64xbf16>
    %c1_i32_130 = arith.constant 1 : i32
    %241 = tpu.dynamic_rotate %228 by %c1_i32_130 dim 0 : vector<8x64xf32>, i32 -> vector<8x64xf32>
    %cst_131 = arith.constant 0.000000e+00 : f32
    %242 = vector.shape_cast %234 : vector<8x1xi1> to vector<8x1xi1>
    %243 = vector.broadcast %242 : vector<8x1xi1> to vector<8x64xi1>
    %244 = vector.broadcast %cst_131 : f32 to vector<8x64xf32>
    %245 = arith.select %243, %244, %241 : vector<8x64xi1>, vector<8x64xf32>
    %246 = arith.truncf %245 : vector<8x64xf32> to vector<8x64xbf16>
    %c7_i32_132 = arith.constant 7 : i32
    %247 = tpu.dynamic_rotate %228 by %c7_i32_132 dim 0 : vector<8x64xf32>, i32 -> vector<8x64xf32>
    %cst_133 = arith.constant 0.000000e+00 : f32
    %248 = vector.shape_cast %239 : vector<8x1xi1> to vector<8x1xi1>
    %249 = vector.broadcast %248 : vector<8x1xi1> to vector<8x64xi1>
    %250 = vector.broadcast %cst_133 : f32 to vector<8x64xf32>
    %251 = arith.select %249, %250, %247 : vector<8x64xi1>, vector<8x64xf32>
    %252 = arith.truncf %251 : vector<8x64xf32> to vector<8x64xbf16>
    %c4 = arith.constant 4 : index
    %c0_134 = arith.constant 0 : index
    %c0_135 = arith.constant 0 : index
    %c0_136 = arith.constant 0 : index
    %253 = vector.load %arg2[%c4, %c0_134, %c0_135, %c0_136] : memref<6x3x64x128xbf16, #tpu.memory_space<vmem>>, vector<1x1x64x64xbf16>
    %254 = vector.shape_cast %253 : vector<1x1x64x64xbf16> to vector<64x64xbf16>
    %cst_137 = arith.constant dense<0.000000e+00> : vector<8x64xf32>
    %255 = tpu.matmul %246, %254, %cst_137 {dimension_numbers = #tpu.dot_dimension_numbers<[1], [0], [0], [1], [0, 0, 1, 1], [], []>} : vector<8x64xbf16>, vector<64x64xbf16>, vector<8x64xf32> -> vector<8x64xf32>
    %c4_138 = arith.constant 4 : index
    %c1_139 = arith.constant 1 : index
    %c0_140 = arith.constant 0 : index
    %c0_141 = arith.constant 0 : index
    %256 = vector.load %arg2[%c4_138, %c1_139, %c0_140, %c0_141] : memref<6x3x64x128xbf16, #tpu.memory_space<vmem>>, vector<1x1x64x64xbf16>
    %257 = vector.shape_cast %256 : vector<1x1x64x64xbf16> to vector<64x64xbf16>
    %cst_142 = arith.constant dense<0.000000e+00> : vector<8x64xf32>
    %258 = tpu.matmul %240, %257, %cst_142 {dimension_numbers = #tpu.dot_dimension_numbers<[1], [0], [0], [1], [0, 0, 1, 1], [], []>} : vector<8x64xbf16>, vector<64x64xbf16>, vector<8x64xf32> -> vector<8x64xf32>
    %259 = arith.addf %255, %258 : vector<8x64xf32>
    %c4_143 = arith.constant 4 : index
    %c2_144 = arith.constant 2 : index
    %c0_145 = arith.constant 0 : index
    %c0_146 = arith.constant 0 : index
    %260 = vector.load %arg2[%c4_143, %c2_144, %c0_145, %c0_146] : memref<6x3x64x128xbf16, #tpu.memory_space<vmem>>, vector<1x1x64x64xbf16>
    %261 = vector.shape_cast %260 : vector<1x1x64x64xbf16> to vector<64x64xbf16>
    %cst_147 = arith.constant dense<0.000000e+00> : vector<8x64xf32>
    %262 = tpu.matmul %252, %261, %cst_147 {dimension_numbers = #tpu.dot_dimension_numbers<[1], [0], [0], [1], [0, 0, 1, 1], [], []>} : vector<8x64xbf16>, vector<64x64xbf16>, vector<8x64xf32> -> vector<8x64xf32>
    %263 = arith.addf %259, %262 : vector<8x64xf32>
    %c4_148 = arith.constant 4 : index
    %c0_149 = arith.constant 0 : index
    %c0_150 = arith.constant 0 : index
    %264 = vector.load %arg3[%c4_148, %c0_149, %c0_150] : memref<6x1x128xf32, #tpu.memory_space<vmem>>, vector<1x1x64xf32>
    %265 = vector.shape_cast %264 : vector<1x1x64xf32> to vector<1x64xf32>
    %266 = vector.broadcast %265 : vector<1x64xf32> to vector<8x64xf32>
    %267 = arith.addf %263, %266 : vector<8x64xf32>
    %cst_151 = arith.constant 0.000000e+00 : f32
    %268 = vector.broadcast %cst_151 : f32 to vector<8x64xf32>
    %269 = arith.maximumf %267, %268 : vector<8x64xf32>
    %270 = arith.truncf %269 : vector<8x64xf32> to vector<8x64xbf16>
    %c1_i32_152 = arith.constant 1 : i32
    %271 = tpu.dynamic_rotate %269 by %c1_i32_152 dim 0 : vector<8x64xf32>, i32 -> vector<8x64xf32>
    %cst_153 = arith.constant 0.000000e+00 : f32
    %272 = vector.shape_cast %234 : vector<8x1xi1> to vector<8x1xi1>
    %273 = vector.broadcast %272 : vector<8x1xi1> to vector<8x64xi1>
    %274 = vector.broadcast %cst_153 : f32 to vector<8x64xf32>
    %275 = arith.select %273, %274, %271 : vector<8x64xi1>, vector<8x64xf32>
    %276 = arith.truncf %275 : vector<8x64xf32> to vector<8x64xbf16>
    %c7_i32_154 = arith.constant 7 : i32
    %277 = tpu.dynamic_rotate %269 by %c7_i32_154 dim 0 : vector<8x64xf32>, i32 -> vector<8x64xf32>
    %cst_155 = arith.constant 0.000000e+00 : f32
    %278 = vector.shape_cast %239 : vector<8x1xi1> to vector<8x1xi1>
    %279 = vector.broadcast %278 : vector<8x1xi1> to vector<8x64xi1>
    %280 = vector.broadcast %cst_155 : f32 to vector<8x64xf32>
    %281 = arith.select %279, %280, %277 : vector<8x64xi1>, vector<8x64xf32>
    %282 = arith.truncf %281 : vector<8x64xf32> to vector<8x64xbf16>
    %c5 = arith.constant 5 : index
    %c0_156 = arith.constant 0 : index
    %c0_157 = arith.constant 0 : index
    %c0_158 = arith.constant 0 : index
    %283 = vector.load %arg2[%c5, %c0_156, %c0_157, %c0_158] : memref<6x3x64x128xbf16, #tpu.memory_space<vmem>>, vector<1x1x64x64xbf16>
    %284 = vector.shape_cast %283 : vector<1x1x64x64xbf16> to vector<64x64xbf16>
    %cst_159 = arith.constant dense<0.000000e+00> : vector<8x64xf32>
    %285 = tpu.matmul %276, %284, %cst_159 {dimension_numbers = #tpu.dot_dimension_numbers<[1], [0], [0], [1], [0, 0, 1, 1], [], []>} : vector<8x64xbf16>, vector<64x64xbf16>, vector<8x64xf32> -> vector<8x64xf32>
    %c5_160 = arith.constant 5 : index
    %c1_161 = arith.constant 1 : index
    %c0_162 = arith.constant 0 : index
    %c0_163 = arith.constant 0 : index
    %286 = vector.load %arg2[%c5_160, %c1_161, %c0_162, %c0_163] : memref<6x3x64x128xbf16, #tpu.memory_space<vmem>>, vector<1x1x64x64xbf16>
    %287 = vector.shape_cast %286 : vector<1x1x64x64xbf16> to vector<64x64xbf16>
    %cst_164 = arith.constant dense<0.000000e+00> : vector<8x64xf32>
    %288 = tpu.matmul %270, %287, %cst_164 {dimension_numbers = #tpu.dot_dimension_numbers<[1], [0], [0], [1], [0, 0, 1, 1], [], []>} : vector<8x64xbf16>, vector<64x64xbf16>, vector<8x64xf32> -> vector<8x64xf32>
    %289 = arith.addf %285, %288 : vector<8x64xf32>
    %c5_165 = arith.constant 5 : index
    %c2_166 = arith.constant 2 : index
    %c0_167 = arith.constant 0 : index
    %c0_168 = arith.constant 0 : index
    %290 = vector.load %arg2[%c5_165, %c2_166, %c0_167, %c0_168] : memref<6x3x64x128xbf16, #tpu.memory_space<vmem>>, vector<1x1x64x64xbf16>
    %291 = vector.shape_cast %290 : vector<1x1x64x64xbf16> to vector<64x64xbf16>
    %cst_169 = arith.constant dense<0.000000e+00> : vector<8x64xf32>
    %292 = tpu.matmul %282, %291, %cst_169 {dimension_numbers = #tpu.dot_dimension_numbers<[1], [0], [0], [1], [0, 0, 1, 1], [], []>} : vector<8x64xbf16>, vector<64x64xbf16>, vector<8x64xf32> -> vector<8x64xf32>
    %293 = arith.addf %289, %292 : vector<8x64xf32>
    %c5_170 = arith.constant 5 : index
    %c0_171 = arith.constant 0 : index
    %c0_172 = arith.constant 0 : index
    %294 = vector.load %arg3[%c5_170, %c0_171, %c0_172] : memref<6x1x128xf32, #tpu.memory_space<vmem>>, vector<1x1x64xf32>
    %295 = vector.shape_cast %294 : vector<1x1x64xf32> to vector<1x64xf32>
    %296 = vector.broadcast %295 : vector<1x64xf32> to vector<8x64xf32>
    %297 = arith.addf %293, %296 : vector<8x64xf32>
    %cst_173 = arith.constant 0.000000e+00 : f32
    %298 = vector.broadcast %cst_173 : f32 to vector<8x64xf32>
    %299 = arith.maximumf %297, %298 : vector<8x64xf32>
    %300 = arith.addf %228, %299 : vector<8x64xf32>
    %301 = arith.truncf %300 : vector<8x64xf32> to vector<8x64xbf16>
    %302 = tpu.iota {dimensions = array<i32: 0>} : vector<8x1xi32>
    %cst_174 = arith.constant 0.000000e+00 : f32
    %303 = vector.broadcast %cst_174 : f32 to vector<8x32xf32>
    %c0_i32_175 = arith.constant 0 : i32
    %304 = vector.broadcast %c0_i32_175 : i32 to vector<8x1xi32>
    %305 = arith.cmpi eq, %302, %304 : vector<8x1xi32>
    %c4_i32_176 = arith.constant 4 : i32
    %306 = vector.broadcast %c4_i32_176 : i32 to vector<8x1xi32>
    %307 = arith.cmpi eq, %302, %306 : vector<8x1xi32>
    %308 = arith.ori %305, %307 : vector<8x1xi1>
    %c0_177 = arith.constant 0 : index
    %c0_178 = arith.constant 0 : index
    %309 = vector.load %arg6[%c0_177, %c0_178] : memref<256x32xbf16, #tpu.memory_space<vmem>>, vector<64x32xbf16>
    %cst_179 = arith.constant dense<0.000000e+00> : vector<8x32xf32>
    %310 = tpu.matmul %301, %309, %cst_179 {dimension_numbers = #tpu.dot_dimension_numbers<[1], [0], [0], [1], [0, 0, 1, 1], [], []>} : vector<8x64xbf16>, vector<64x32xbf16>, vector<8x32xf32> -> vector<8x32xf32>
    %cst_180 = arith.constant 0.000000e+00 : f32
    %311 = vector.shape_cast %308 : vector<8x1xi1> to vector<8x1xi1>
    %312 = vector.broadcast %311 : vector<8x1xi1> to vector<8x32xi1>
    %313 = vector.broadcast %cst_180 : f32 to vector<8x32xf32>
    %314 = arith.select %312, %310, %313 : vector<8x32xi1>, vector<8x32xf32>
    %315 = arith.addf %303, %314 : vector<8x32xf32>
    %c1_i32_181 = arith.constant 1 : i32
    %316 = vector.broadcast %c1_i32_181 : i32 to vector<8x1xi32>
    %317 = arith.cmpi eq, %302, %316 : vector<8x1xi32>
    %c5_i32 = arith.constant 5 : i32
    %318 = vector.broadcast %c5_i32 : i32 to vector<8x1xi32>
    %319 = arith.cmpi eq, %302, %318 : vector<8x1xi32>
    %320 = arith.ori %317, %319 : vector<8x1xi1>
    %c64 = arith.constant 64 : index
    %c0_182 = arith.constant 0 : index
    %321 = vector.load %arg6[%c64, %c0_182] : memref<256x32xbf16, #tpu.memory_space<vmem>>, vector<64x32xbf16>
    %cst_183 = arith.constant dense<0.000000e+00> : vector<8x32xf32>
    %322 = tpu.matmul %301, %321, %cst_183 {dimension_numbers = #tpu.dot_dimension_numbers<[1], [0], [0], [1], [0, 0, 1, 1], [], []>} : vector<8x64xbf16>, vector<64x32xbf16>, vector<8x32xf32> -> vector<8x32xf32>
    %cst_184 = arith.constant 0.000000e+00 : f32
    %323 = vector.shape_cast %320 : vector<8x1xi1> to vector<8x1xi1>
    %324 = vector.broadcast %323 : vector<8x1xi1> to vector<8x32xi1>
    %325 = vector.broadcast %cst_184 : f32 to vector<8x32xf32>
    %326 = arith.select %324, %322, %325 : vector<8x32xi1>, vector<8x32xf32>
    %327 = arith.addf %315, %326 : vector<8x32xf32>
    %c2_i32 = arith.constant 2 : i32
    %328 = vector.broadcast %c2_i32 : i32 to vector<8x1xi32>
    %329 = arith.cmpi eq, %302, %328 : vector<8x1xi32>
    %c6_i32 = arith.constant 6 : i32
    %330 = vector.broadcast %c6_i32 : i32 to vector<8x1xi32>
    %331 = arith.cmpi eq, %302, %330 : vector<8x1xi32>
    %332 = arith.ori %329, %331 : vector<8x1xi1>
    %c128 = arith.constant 128 : index
    %c0_185 = arith.constant 0 : index
    %333 = vector.load %arg6[%c128, %c0_185] : memref<256x32xbf16, #tpu.memory_space<vmem>>, vector<64x32xbf16>
    %cst_186 = arith.constant dense<0.000000e+00> : vector<8x32xf32>
    %334 = tpu.matmul %301, %333, %cst_186 {dimension_numbers = #tpu.dot_dimension_numbers<[1], [0], [0], [1], [0, 0, 1, 1], [], []>} : vector<8x64xbf16>, vector<64x32xbf16>, vector<8x32xf32> -> vector<8x32xf32>
    %cst_187 = arith.constant 0.000000e+00 : f32
    %335 = vector.shape_cast %332 : vector<8x1xi1> to vector<8x1xi1>
    %336 = vector.broadcast %335 : vector<8x1xi1> to vector<8x32xi1>
    %337 = vector.broadcast %cst_187 : f32 to vector<8x32xf32>
    %338 = arith.select %336, %334, %337 : vector<8x32xi1>, vector<8x32xf32>
    %339 = arith.addf %327, %338 : vector<8x32xf32>
    %c3_i32_188 = arith.constant 3 : i32
    %340 = vector.broadcast %c3_i32_188 : i32 to vector<8x1xi32>
    %341 = arith.cmpi eq, %302, %340 : vector<8x1xi32>
    %c7_i32_189 = arith.constant 7 : i32
    %342 = vector.broadcast %c7_i32_189 : i32 to vector<8x1xi32>
    %343 = arith.cmpi eq, %302, %342 : vector<8x1xi32>
    %344 = arith.ori %341, %343 : vector<8x1xi1>
    %c192 = arith.constant 192 : index
    %c0_190 = arith.constant 0 : index
    %345 = vector.load %arg6[%c192, %c0_190] : memref<256x32xbf16, #tpu.memory_space<vmem>>, vector<64x32xbf16>
    %cst_191 = arith.constant dense<0.000000e+00> : vector<8x32xf32>
    %346 = tpu.matmul %301, %345, %cst_191 {dimension_numbers = #tpu.dot_dimension_numbers<[1], [0], [0], [1], [0, 0, 1, 1], [], []>} : vector<8x64xbf16>, vector<64x32xbf16>, vector<8x32xf32> -> vector<8x32xf32>
    %cst_192 = arith.constant 0.000000e+00 : f32
    %347 = vector.shape_cast %344 : vector<8x1xi1> to vector<8x1xi1>
    %348 = vector.broadcast %347 : vector<8x1xi1> to vector<8x32xi1>
    %349 = vector.broadcast %cst_192 : f32 to vector<8x32xf32>
    %350 = arith.select %348, %346, %349 : vector<8x32xi1>, vector<8x32xf32>
    %351 = arith.addf %339, %350 : vector<8x32xf32>
    %352 = tpu.iota {dimensions = array<i32: 1>} : vector<2x8xi32>
    %353 = tpu.iota {dimensions = array<i32: 0>} : vector<2x8xi32>
    %c4_i32_193 = arith.constant 4 : i32
    %354 = vector.broadcast %c4_i32_193 : i32 to vector<2x8xi32>
    %355 = arith.muli %353, %354 : vector<2x8xi32>
    %356 = arith.cmpi sge, %352, %355 : vector<2x8xi32>
    %c1_i32_194 = arith.constant 1 : i32
    %357 = vector.broadcast %c1_i32_194 : i32 to vector<2x8xi32>
    %358 = arith.addi %353, %357 : vector<2x8xi32>
    %c4_i32_195 = arith.constant 4 : i32
    %359 = vector.broadcast %c4_i32_195 : i32 to vector<2x8xi32>
    %360 = arith.muli %358, %359 : vector<2x8xi32>
    %361 = arith.cmpi slt, %352, %360 : vector<2x8xi32>
    %362 = arith.andi %356, %361 : vector<2x8xi1>
    %cst_196 = arith.constant 1.000000e+00 : f32
    %cst_197 = arith.constant 0.000000e+00 : f32
    %363 = vector.broadcast %cst_196 : f32 to vector<2x8xf32>
    %364 = vector.broadcast %cst_197 : f32 to vector<2x8xf32>
    %365 = arith.select %362, %363, %364 : vector<2x8xi1>, vector<2x8xf32>
    %cst_198 = arith.constant dense<0.000000e+00> : vector<2x32xf32>
    %366 = tpu.matmul %365, %351, %cst_198 {dimension_numbers = #tpu.dot_dimension_numbers<[1], [0], [0], [1], [0, 0, 1, 1], [], []>} : vector<2x8xf32>, vector<8x32xf32>, vector<2x32xf32> -> vector<2x32xf32>
    %c0_199 = arith.constant 0 : index
    %c0_200 = arith.constant 0 : index
    %367 = vector.load %arg7[%c0_199, %c0_200] : memref<1x32xf32, #tpu.memory_space<vmem>>, vector<1x32xf32>
    %368 = vector.broadcast %367 : vector<1x32xf32> to vector<2x32xf32>
    %369 = arith.addf %366, %368 : vector<2x32xf32>
    %cst_201 = arith.constant 0.000000e+00 : f32
    %370 = vector.broadcast %cst_201 : f32 to vector<2x32xf32>
    %371 = arith.maximumf %369, %370 : vector<2x32xf32>
    %c0_202 = arith.constant 0 : index
    %c0_203 = arith.constant 0 : index
    %372 = vector.load %arg8[%c0_202, %c0_203] : memref<2x32xf32, #tpu.memory_space<vmem>>, vector<2x32xf32>
    tpu.vector_store %arg8[%c0_202, %c0_203], %371 {strides = array<i32>} : memref<2x32xf32, #tpu.memory_space<vmem>>, vector<2x32xf32>,
    return
  }
  func.func @transform_0(%arg0: i32) -> (i32, i32) {
    %c0_i32 = arith.constant 0 : i32
    %c0_i32_0 = arith.constant 0 : i32
    %c0_i32_1 = arith.constant 0 : i32
    return %c0_i32, %c0_i32_0 : i32, i32
  }
  func.func @transform_1(%arg0: i32) -> (i32, i32, i32, i32) {
    %c0_i32 = arith.constant 0 : i32
    %c0_i32_0 = arith.constant 0 : i32
    %c0_i32_1 = arith.constant 0 : i32
    %c0_i32_2 = arith.constant 0 : i32
    %c0_i32_3 = arith.constant 0 : i32
    return %c0_i32, %c0_i32_0, %c0_i32_1, %c0_i32_2 : i32, i32, i32, i32
  }
  func.func @transform_2(%arg0: i32) -> (i32, i32, i32) {
    %c0_i32 = arith.constant 0 : i32
    %c0_i32_0 = arith.constant 0 : i32
    %c0_i32_1 = arith.constant 0 : i32
    %c0_i32_2 = arith.constant 0 : i32
    return %c0_i32, %c0_i32_0, %c0_i32_1 : i32, i32, i32
  }
  func.func @transform_3(%arg0: i32) -> (i32, i32, i32) {
    %c0_i32 = arith.constant 0 : i32
    %c0_i32_0 = arith.constant 0 : i32
    %c0_i32_1 = arith.constant 0 : i32
    %c0_i32_2 = arith.constant 0 : i32
    return %c0_i32, %c0_i32_0, %c0_i32_1 : i32, i32, i32
  }
  func.func @transform_4(%arg0: i32) -> (i32, i32, i32) {
    %c0_i32 = arith.constant 0 : i32
    %c0_i32_0 = arith.constant 0 : i32
    %c0_i32_1 = arith.constant 0 : i32
    %c0_i32_2 = arith.constant 0 : i32
    return %c0_i32, %c0_i32_0, %c0_i32_1 : i32, i32, i32
  }
  func.func @transform_5(%arg0: i32) -> (i32, i32) {
    %c0_i32 = arith.constant 0 : i32
    %c0_i32_0 = arith.constant 0 : i32
    %c0_i32_1 = arith.constant 0 : i32
    return %c0_i32, %c0_i32_0 : i32, i32
  }
  func.func @transform_6(%arg0: i32) -> (i32, i32) {
    %c0_i32 = arith.constant 0 : i32
    %c0_i32_0 = arith.constant 0 : i32
    %c0_i32_1 = arith.constant 0 : i32
    return %c0_i32, %c0_i32_0 : i32, i32
  }
  func.func @transform_7(%arg0: i32) -> (i32, i32) {
    %c0_i32 = arith.constant 0 : i32
    %c0_i32_0 = arith.constant 0 : i32
    %c0_i32_1 = arith.constant 0 : i32
    return %c0_i32, %c0_i32_0 : i32, i32
  }
}

</mosaic_0001>

<llo_original>
// kernel: _lambda_.1
$region0: #{_lambda_.1}
  #allocation0 [shape = 'u32[]', space=smem, size = 0x4, offset = 0x4, fixed_abs, tag = 'smem constant byte address 0x4 - core index']
  #allocation1 [shape = 'u32[72,128]{1,0:T(1,128)}', space=vmem, size = 0x9000, scoped, tag = 'internal scratch']
  %s0 = inlined_call_operand.vmem [shape: f32[32,64], index: 0, kind: input, shape index: {}]
  %s1 = inlined_call_operand.hbm [shape: bf16[6,3,64,128], index: 1, kind: input, shape index: {}]
  %s2 = inlined_call_operand.vmem [shape: f32[6,1,128], index: 2, kind: input, shape index: {}]
  %s3 = inlined_call_operand.vmem [shape: bf16[2,16,32], index: 3, kind: input, shape index: {}]
  %s4 = inlined_call_operand.vmem [shape: bf16[2,128,64], index: 4, kind: input, shape index: {}]
  %s5 = inlined_call_operand.vmem [shape: bf16[256,32], index: 5, kind: input, shape index: {}]
  %s6 = inlined_call_operand.vmem [shape: f32[1,32], index: 6, kind: input, shape index: {}]
  %s7 = inlined_call_operand.hbm [shape: f32[2,32], index: 7, kind: output, shape index: {}]
  %s8 = sld [smem:[#allocation0]]
  $region42: #{_lambda_.1} parent=0
    _
  %s10 = ssub.s32 1, %s8
  %s11 = scalar_select 0, %s10, %s8
  $region1: #{_lambda_.1} parent=0
    #allocation2 [shape = 'u8[294912]{0}', space=vmem, size = 0x48000, scoped, tag = 'input window, operand 1, single buffered']
    #allocation3 [shape = 's32[1]{0}', space=sflag, size = 0x4, scoped, tag = 'scoped memory for _lambda_.1']
    #allocation4 [shape = 's32[1]{0}', space=sflag, size = 0x4, scoped, tag = 'scoped memory for _lambda_.1']
    #allocation5 [shape = 'u8[1024]{0}', space=vmem, size = 0x400, scoped, tag = 'output window, operand 0, single buffered']
    %12 = vsyncpa [#allocation3], 0
    %13 = vsyncpa [#allocation4], 0
    // Predicated region
    $region2: #{_lambda_.1} parent=1 // pred_check
      _
    $region3: #{_lambda_.1} parent=1 // pred_check_branch
      %15 = sbr.rel (0) target = $region5
    $region4: #{_lambda_.1} parent=1 // pred_region
      _
    $region5: #{_lambda_.1} parent=1 // pred_fallthru
      _
    // Predicated region
    $region6: #{_lambda_.1} parent=1 // pred_check
      _
    $region7: #{_lambda_.1} parent=1 // pred_check_branch
      %17 = sbr.rel (0) target = $region9
    $region8: #{_lambda_.1} parent=1 // pred_region
      %19 = vsyncadd [#allocation3], 0
      %s20 = sshll.u32 %s1, 4
      %s21 = int_to_ptr.hbm [resolvable:$true] %s20
      %s22 = sshll.u32 [#allocation2], 4
      %s23 = int_to_ptr.vmem [resolvable:$true] %s22
      %28 = dma.hbm_to_vmem [thread:$0]  %s21, 9216, %s23, [#allocation3], 64, 64, 4
    $region9: #{_lambda_.1} parent=1 // pred_fallthru
      _
    // Predicated region
    $region10: #{_lambda_.1} parent=1 // pred_check
      _
    $region11: #{_lambda_.1} parent=1 // pred_check_branch
      %30 = sbr.rel (0) target = $region13
    $region12: #{_lambda_.1} parent=1 // pred_region
      _
    $region13: #{_lambda_.1} parent=1 // pred_fallthru
      _
    // Predicated region
    $region14: #{_lambda_.1} parent=1 // pred_check
      _
    $region15: #{_lambda_.1} parent=1 // pred_check_branch
      %32 = sbr.rel (0) target = $region17
    $region16: #{_lambda_.1} parent=1 // pred_region
      _
    $region17: #{_lambda_.1} parent=1 // pred_fallthru
      _
    // Predicated region
    $region18: #{_lambda_.1} parent=1 // pred_check
      _
    $region19: #{_lambda_.1} parent=1 // pred_check_branch
      %34 = sbr.rel (0) target = $region21
    $region20: #{_lambda_.1} parent=1 // pred_region
      _
    $region21: #{_lambda_.1} parent=1 // pred_fallthru
      _
    // Predicated region
    $region22: #{_lambda_.1} parent=1 // pred_check
      _
    $region23: #{_lambda_.1} parent=1 // pred_check_branch
      %36 = sbr.rel (0) target = $region25
    $region24: #{_lambda_.1} parent=1 // pred_region
      _
    $region25: #{_lambda_.1} parent=1 // pred_fallthru
      _
    // Predicated region
    $region26: #{_lambda_.1} parent=1 // pred_check
      _
    $region27: #{_lambda_.1} parent=1 // pred_check_branch
      %38 = sbr.rel (0) target = $region29
    $region28: #{_lambda_.1} parent=1 // pred_region
      _
    $region29: #{_lambda_.1} parent=1 // pred_fallthru
      _
    // Predicated region
    $region30: #{_lambda_.1} parent=1 // pred_check
      _
    $region31: #{_lambda_.1} parent=1 // pred_check_branch
      %40 = sbr.rel (0) target = $region33
    $region32: #{_lambda_.1} parent=1 // pred_region
      %42 = dma.done [#allocation3], 9216
    $region33: #{_lambda_.1} parent=1 // pred_fallthru
      _
    %v44 = vld [vmem:[%s0] sm:$0xff]
    %v45 = vld [vmem:[%s0 + $0x8] sm:$0xff]
    %v46 = vld [vmem:[%s0 + $0x10] sm:$0xff]
    %v47 = vld [vmem:[%s0 + $0x18] sm:$0xff]
    %v48 = vlaneseq
    %v49 = vshrl.u32 %v48, 7
    %v50 = vadd.s32 %v49, 8
    %v51 = vadd.s32 %v49, 16
    %v52 = vadd.s32 %v49, 24
    %vm53 = vcmp.eq.s32.totalorder %v49, 0
    %vm54 = vcmp.eq.s32.totalorder %v50, 0
    %vm55 = vcmp.eq.s32.totalorder %v51, 0
    %vm56 = vcmp.eq.s32.totalorder %v52, 0
    %vm57 = vcmp.eq.s32.totalorder %v49, 16
    %vm58 = vcmp.eq.s32.totalorder %v50, 16
    %vm59 = vcmp.eq.s32.totalorder %v51, 16
    %vm60 = vcmp.eq.s32.totalorder %v52, 16
    %vm61 = vmor %vm53, %vm57
    %vm62 = vmor %vm54, %vm58
    %vm63 = vmor %vm55, %vm59
    %vm64 = vmor %vm56, %vm60
    %vm65 = vcmp.eq.s32.totalorder %v49, 15
    %vm66 = vcmp.eq.s32.totalorder %v50, 15
    %vm67 = vcmp.eq.s32.totalorder %v51, 15
    %vm68 = vcmp.eq.s32.totalorder %v52, 15
    %vm69 = vcmp.eq.s32.totalorder %v49, 31
    %vm70 = vcmp.eq.s32.totalorder %v50, 31
    %vm71 = vcmp.eq.s32.totalorder %v51, 31
    %vm72 = vcmp.eq.s32.totalorder %v52, 31
    %vm73 = vmor %vm65, %vm69
    %vm74 = vmor %vm66, %vm70
    %vm75 = vmor %vm67, %vm71
    %vm76 = vmor %vm68, %vm72
    %v77 = vpack.c.bf16 %v45, %v44
    %v78 = vpack.c.bf16 %v47, %v46
    %v79 = vrot.slane %v44, 7
    %v80 = vrot.slane %v45, 7
    %v81 = vrot.slane %v46, 7
    %v82 = vrot.slane %v47, 7
    %vm83 = vcmp.lt.s32.totalorder %v49, 1
    %v84 = vsel %vm83, %v81, %v82
    %v85 = vsel %vm83, %v80, %v81
    %v86 = vsel %vm83, %v79, %v80
    %v87 = vsel %vm83, %v82, %v79
    %v88 = vsel %vm61, 1, 0
    %v89 = vsel %vm62, 1, 0
    %v90 = vsel %vm63, 1, 0
    %v91 = vsel %vm64, 1, 0
    %vm92 = vcmp.eq.s32.totalorder %v88, 1
    %vm93 = vcmp.eq.s32.totalorder %v89, 1
    %vm94 = vcmp.eq.s32.totalorder %v90, 1
    %vm95 = vcmp.eq.s32.totalorder %v91, 1
    %v96 = vsel %vm92, 0.0, %v87
    %v97 = vsel %vm93, 0.0, %v86
    %v98 = vsel %vm94, 0.0, %v85
    %v99 = vsel %vm95, 0.0, %v84
    %v100 = vpack.c.bf16 %v97, %v96
    %v101 = vpack.c.bf16 %v99, %v98
    %v102 = vrot.slane %v44, 1
    %v103 = vrot.slane %v45, 1
    %v104 = vrot.slane %v46, 1
    %v105 = vrot.slane %v47, 1
    %vm106 = vcmp.lt.s32.totalorder %v49, 7
    %v107 = vsel %vm106, %v104, %v105
    %v108 = vsel %vm106, %v103, %v104
    %v109 = vsel %vm106, %v102, %v103
    %v110 = vsel %vm106, %v105, %v102
    %v111 = vsel %vm73, 1, 0
    %v112 = vsel %vm74, 1, 0
    %v113 = vsel %vm75, 1, 0
    %v114 = vsel %vm76, 1, 0
    %vm115 = vcmp.eq.s32.totalorder %v111, 1
    %vm116 = vcmp.eq.s32.totalorder %v112, 1
    %vm117 = vcmp.eq.s32.totalorder %v113, 1
    %vm118 = vcmp.eq.s32.totalorder %v114, 1
    %v119 = vsel %vm115, 0.0, %v109
    %v120 = vsel %vm116, 0.0, %v108
    %v121 = vsel %vm117, 0.0, %v107
    %v122 = vsel %vm118, 0.0, %v110
    %v123 = vpack.c.bf16 %v120, %v119
    %v124 = vpack.c.bf16 %v122, %v121
    %v125 = vld [vmem:[#allocation2] sm:$0xf]
    %v126 = vld [vmem:[#allocation2 + $0x4] sm:$0xf]
    %v127 = vld [vmem:[#allocation2 + $0x8] sm:$0xf]
    %v128 = vld [vmem:[#allocation2 + $0xc] sm:$0xf]
    %v129 = vld [vmem:[#allocation2 + $0x10] sm:$0xf]
    %v130 = vld [vmem:[#allocation2 + $0x14] sm:$0xf]
    %v131 = vld [vmem:[#allocation2 + $0x18] sm:$0xf]
    %v132 = vld [vmem:[#allocation2 + $0x1c] sm:$0xf]
    %s133 = scalar_lea.vmem [#allocation2], 32
    %v134 = vld [vmem:[%s133] sm:$0xf]
    %v135 = vld [vmem:[%s133 + $0x4] sm:$0xf]
    %v136 = vld [vmem:[%s133 + $0x8] sm:$0xf]
    %v137 = vld [vmem:[%s133 + $0xc] sm:$0xf]
    %v138 = vld [vmem:[%s133 + $0x10] sm:$0xf]
    %v139 = vld [vmem:[%s133 + $0x14] sm:$0xf]
    %v140 = vld [vmem:[%s133 + $0x18] sm:$0xf]
    %v141 = vld [vmem:[%s133 + $0x1c] sm:$0xf]
    %v150 = vunpack.c.l.b16 %v134
    %v151 = vunpack.c.l.b16 %v135
    %v152 = vunpack.c.l.b16 %v136
    %v153 = vunpack.c.l.b16 %v137
    %v154 = vunpack.c.l.b16 %v138
    %v155 = vunpack.c.l.b16 %v139
    %v156 = vunpack.c.l.b16 %v140
    %v157 = vunpack.c.l.b16 %v141
    %v158 = vpack.c.b16 %v151, %v150
    %v159 = vpack.c.b16 %v153, %v152
    %v160 = vpack.c.b16 %v155, %v154
    %v161 = vpack.c.b16 %v157, %v156
    %vm166 = vcmask 523264
    %v168 = vsel %vm166, %v77, 0
    %v171 = vsel %vm166, %v78, 0
    %173 = vmatpush.bf16.msra.mxu0 0
    %174 = vmatpush.bf16.msra.mxu0 0
    %175 = vmatpush.bf16.msra.mxu0 0
    %176 = vmatpush.bf16.msra.mxu0 0
    %177 = vmatpush.bf16.msra.mxu0 %v161
    %178 = vmatpush.bf16.msra.mxu0 %v160
    %179 = vmatpush.bf16.msra.mxu0 %v159
    %180 = vmatpush.bf16.msra.mxu0 %v158
    %181 = vmatmul.bf16.gmra.mxu0 %v168
    %v182 = vpop.f32.mrf.mxu0
    %v183 = vadd.f32 0.0, %v182
    %v184 = vpop.f32.mrf.mxu0
    %v185 = vadd.f32 0.0, %v184
    %186 = vmatmul.bf16.gmra.mxu0 %v171
    %v187 = vpop.f32.mrf.mxu0
    %v188 = vadd.f32 0.0, %v187
    %v189 = vpop.f32.mrf.mxu0
    %v190 = vadd.f32 0.0, %v189
    %191 = vdwg.mxu0
    %v200 = vunpack.c.l.b16 %v125
    %v201 = vunpack.c.l.b16 %v126
    %v202 = vunpack.c.l.b16 %v127
    %v203 = vunpack.c.l.b16 %v128
    %v204 = vunpack.c.l.b16 %v129
    %v205 = vunpack.c.l.b16 %v130
    %v206 = vunpack.c.l.b16 %v131
    %v207 = vunpack.c.l.b16 %v132
    %v208 = vpack.c.b16 %v201, %v200
    %v209 = vpack.c.b16 %v203, %v202
    %v210 = vpack.c.b16 %v205, %v204
    %v211 = vpack.c.b16 %v207, %v206
    %v217 = vsel %vm166, %v100, 0
    %v220 = vsel %vm166, %v101, 0
    %222 = vmatpush.bf16.msra.mxu0 0
    %223 = vmatpush.bf16.msra.mxu0 0
    %224 = vmatpush.bf16.msra.mxu0 0
    %225 = vmatpush.bf16.msra.mxu0 0
    %226 = vmatpush.bf16.msra.mxu0 %v211
    %227 = vmatpush.bf16.msra.mxu0 %v210
    %228 = vmatpush.bf16.msra.mxu0 %v209
    %229 = vmatpush.bf16.msra.mxu0 %v208
    %230 = vmatmul.bf16.gmra.mxu0 %v217
    %v231 = vpop.f32.mrf.mxu0
    %v232 = vadd.f32 %v183, %v231
    %v233 = vpop.f32.mrf.mxu0
    %v234 = vadd.f32 %v185, %v233
    %235 = vmatmul.bf16.gmra.mxu0 %v220
    %v236 = vpop.f32.mrf.mxu0
    %v237 = vadd.f32 %v188, %v236
    %v238 = vpop.f32.mrf.mxu0
    %v239 = vadd.f32 %v190, %v238
    %240 = vdwg.mxu0
    %s241 = scalar_lea.vmem [#allocation2], 64
    %v242 = vld [vmem:[%s241] sm:$0xf]
    %v243 = vld [vmem:[%s241 + $0x4] sm:$0xf]
    %v244 = vld [vmem:[%s241 + $0x8] sm:$0xf]
    %v245 = vld [vmem:[%s241 + $0xc] sm:$0xf]
    %v246 = vld [vmem:[%s241 + $0x10] sm:$0xf]
    %v247 = vld [vmem:[%s241 + $0x14] sm:$0xf]
    %v248 = vld [vmem:[%s241 + $0x18] sm:$0xf]
    %v249 = vld [vmem:[%s241 + $0x1c] sm:$0xf]
    %v258 = vunpack.c.l.b16 %v242
    %v259 = vunpack.c.l.b16 %v243
    %v260 = vunpack.c.l.b16 %v244
    %v261 = vunpack.c.l.b16 %v245
    %v262 = vunpack.c.l.b16 %v246
    %v263 = vunpack.c.l.b16 %v247
    %v264 = vunpack.c.l.b16 %v248
    %v265 = vunpack.c.l.b16 %v249
    %v266 = vpack.c.b16 %v259, %v258
    %v267 = vpack.c.b16 %v261, %v260
    %v268 = vpack.c.b16 %v263, %v262
    %v269 = vpack.c.b16 %v265, %v264
    %v275 = vsel %vm166, %v123, 0
    %v278 = vsel %vm166, %v124, 0
    %280 = vmatpush.bf16.msra.mxu0 0
    %281 = vmatpush.bf16.msra.mxu0 0
    %282 = vmatpush.bf16.msra.mxu0 0
    %283 = vmatpush.bf16.msra.mxu0 0
    %284 = vmatpush.bf16.msra.mxu0 %v269
    %285 = vmatpush.bf16.msra.mxu0 %v268
    %286 = vmatpush.bf16.msra.mxu0 %v267
    %287 = vmatpush.bf16.msra.mxu0 %v266
    %288 = vmatmul.bf16.gmra.mxu0 %v275
    %v289 = vpop.f32.mrf.mxu0
    %v290 = vadd.f32 0.0, %v289
    %v291 = vpop.f32.mrf.mxu0
    %v292 = vadd.f32 0.0, %v291
    %293 = vmatmul.bf16.gmra.mxu0 %v278
    %v294 = vpop.f32.mrf.mxu0
    %v295 = vadd.f32 0.0, %v294
    %v296 = vpop.f32.mrf.mxu0
    %v297 = vadd.f32 0.0, %v296
    %298 = vdwg.mxu0
    %v299 = vadd.f32 %v232, %v290
    %v300 = vadd.f32 %v234, %v292
    %v301 = vadd.f32 %v237, %v295
    %v302 = vadd.f32 %v239, %v297
    %v303 = vld [vmem:[%s2] sm:$0x1]
    %v305 = vperm.slane %v303, 0
    %v307 = vadd.f32 %v299, %v305
    %v308 = vadd.f32 %v300, %v305
    %v309 = vadd.f32 %v301, %v305
    %v310 = vadd.f32 %v302, %v305
    %v311 = vmax.f32 %v307, 0.0
    %v312 = vmax.f32 %v308, 0.0
    %v313 = vmax.f32 %v309, 0.0
    %v314 = vmax.f32 %v310, 0.0
    %v315 = vrot.slane %v311, 7
    %v316 = vrot.slane %v312, 7
    %v317 = vrot.slane %v313, 7
    %v318 = vrot.slane %v314, 7
    %v319 = vsel %vm83, %v317, %v318
    %v320 = vsel %vm83, %v316, %v317
    %v321 = vsel %vm83, %v315, %v316
    %v322 = vsel %vm83, %v318, %v315
    %v323 = vsel %vm92, 0.0, %v322
    %v324 = vsel %vm93, 0.0, %v321
    %v325 = vsel %vm94, 0.0, %v320
    %v326 = vsel %vm95, 0.0, %v319
    %v327 = vrot.slane %v311, 1
    %v328 = vrot.slane %v312, 1
    %v329 = vrot.slane %v313, 1
    %v330 = vrot.slane %v314, 1
    %v331 = vsel %vm106, %v329, %v330
    %v332 = vsel %vm106, %v328, %v329
    %v333 = vsel %vm106, %v327, %v328
    %v334 = vsel %vm106, %v330, %v327
    %v335 = vsel %vm115, 0.0, %v333
    %v336 = vsel %vm116, 0.0, %v332
    %v337 = vsel %vm117, 0.0, %v331
    %v338 = vsel %vm118, 0.0, %v334
    %v339 = vmax.f32 %v323, %v335
    %v340 = vmax.f32 %v324, %v336
    %v341 = vmax.f32 %v325, %v337
    %v342 = vmax.f32 %v326, %v338
    %v343 = vmax.f32 %v311, %v339
    %v344 = vmax.f32 %v312, %v340
    %v345 = vmax.f32 %v313, %v341
    %v346 = vmax.f32 %v314, %v342
    %v347 = vld [vmem:[%s3] sm:$0xf]
    %v348 = vld [vmem:[%s3 + $0x4] sm:$0xf]
    %v349 = vpack.c.bf16 %v344, %v343
    %v350 = vpack.c.bf16 %v346, %v345
    %v353 = vunpack.c.l.b16 %v347
    %v354 = vunpack.c.l.b16 %v348
    %v355 = vpack.c.b16 %v354, %v353
    %vm356 = vcmask 261120
    %v358 = vsel %vm356, %v355, 0
    %360 = vmatpush.bf16.msra.mxu0 0
    %361 = vmatpush.bf16.msra.mxu0 0
    %362 = vmatpush.bf16.msra.mxu0 0
    %363 = vmatpush.bf16.msra.mxu0 0
    %364 = vmatpush.bf16.msra.mxu0 0
    %365 = vmatpush.bf16.msra.mxu0 0
    %366 = vmatpush.bf16.msra.mxu0 %v350
    %367 = vmatpush.bf16.msra.mxu0 %v349
    %368 = vmatmul.bf16.gmra.mxu0 %v358
    %v369 = vpop.f32.mrf.mxu0
    %v370 = vadd.f32 0.0, %v369
    %v371 = vpop.f32.mrf.mxu0
    %v372 = vadd.f32 0.0, %v371
    %373 = vdwg.mxu0
    %v374 = vlaneseq
    %v375 = vand.u32 %v374, 127
    %vm376 = vcmp.lt.s32.totalorder %v375, 8
    %377 = vrot.lane.b32.xlu0 %v370, 8
    %v378 = vpop.permute.xlu0 %377
    %379 = vrot.lane.b32.xlu0 %v372, 8
    %v380 = vpop.permute.xlu0 %379
    %v381 = vsel %vm376, 1, 0
    %vm382 = vcmp.eq.s32.totalorder %v381, 1
    %v383 = vsel %vm382, 0.0, %v378
    %v384 = vsel %vm382, 0.0, %v380
    %vm385 = vcmp.ge.s32.totalorder %v375, 120
    %386 = vrot.lane.b32.xlu0 %v370, 120
    %v387 = vpop.permute.xlu0 %386
    %388 = vrot.lane.b32.xlu0 %v372, 120
    %v389 = vpop.permute.xlu0 %388
    %v390 = vsel %vm385, 1, 0
    %vm391 = vcmp.eq.s32.totalorder %v390, 1
    %v392 = vsel %vm391, 0.0, %v387
    %v393 = vsel %vm391, 0.0, %v389
    %v394 = vmax.f32 %v383, %v392
    %v395 = vmax.f32 %v384, %v393
    %v396 = vmax.f32 %v370, %v394
    %v397 = vmax.f32 %v372, %v395
    %v398 = vpack.c.bf16 %v397, %v396
    %v399 = vld [vmem:[%s4] sm:$0xf]
    %v400 = vld [vmem:[%s4 + $0x4] sm:$0xf]
    %v401 = vld [vmem:[%s4 + $0x8] sm:$0xf]
    %v402 = vld [vmem:[%s4 + $0xc] sm:$0xf]
    %v403 = vld [vmem:[%s4 + $0x10] sm:$0xf]
    %v404 = vld [vmem:[%s4 + $0x14] sm:$0xf]
    %v405 = vld [vmem:[%s4 + $0x18] sm:$0xf]
    %v406 = vld [vmem:[%s4 + $0x1c] sm:$0xf]
    %v407 = vld [vmem:[%s4 + $0x20] sm:$0xf]
    %v408 = vld [vmem:[%s4 + $0x24] sm:$0xf]
    %v409 = vld [vmem:[%s4 + $0x28] sm:$0xf]
    %v410 = vld [vmem:[%s4 + $0x2c] sm:$0xf]
    %v411 = vld [vmem:[%s4 + $0x30] sm:$0xf]
    %v412 = vld [vmem:[%s4 + $0x34] sm:$0xf]
    %v413 = vld [vmem:[%s4 + $0x38] sm:$0xf]
    %v414 = vld [vmem:[%s4 + $0x3c] sm:$0xf]
    %v431 = vunpack.c.l.b16 %v399
    %v432 = vunpack.c.l.b16 %v400
    %v433 = vunpack.c.l.b16 %v401
    %v434 = vunpack.c.l.b16 %v402
    %v435 = vunpack.c.l.b16 %v403
    %v436 = vunpack.c.l.b16 %v404
    %v437 = vunpack.c.l.b16 %v405
    %v438 = vunpack.c.l.b16 %v406
    %v439 = vunpack.c.l.b16 %v407
    %v440 = vunpack.c.l.b16 %v408
    %v441 = vunpack.c.l.b16 %v409
    %v442 = vunpack.c.l.b16 %v410
    %v443 = vunpack.c.l.b16 %v411
    %v444 = vunpack.c.l.b16 %v412
    %v445 = vunpack.c.l.b16 %v413
    %v446 = vunpack.c.l.b16 %v414
    %v447 = vpack.c.b16 %v432, %v431
    %v448 = vpack.c.b16 %v434, %v433
    %v449 = vpack.c.b16 %v436, %v435
    %v450 = vpack.c.b16 %v438, %v437
    %v451 = vpack.c.b16 %v440, %v439
    %v452 = vpack.c.b16 %v442, %v441
    %v453 = vpack.c.b16 %v444, %v443
    %v454 = vpack.c.b16 %v446, %v445
    %463 = vmatpush.bf16.msra.mxu0 %v454
    %464 = vmatpush.bf16.msra.mxu0 %v453
    %465 = vmatpush.bf16.msra.mxu0 %v452
    %466 = vmatpush.bf16.msra.mxu0 %v451
    %467 = vmatpush.bf16.msra.mxu0 %v450
    %468 = vmatpush.bf16.msra.mxu0 %v449
    %469 = vmatpush.bf16.msra.mxu0 %v448
    %470 = vmatpush.bf16.msra.mxu0 %v447
    %471 = vmatmul.bf16.gmra.mxu0 %v398
    %v472 = vpop.f32.mrf.mxu0
    %v473 = vadd.f32 0.0, %v472
    %v474 = vpop.f32.mrf.mxu0
    %v475 = vadd.f32 0.0, %v474
    %476 = vdwg.mxu0
    %vm477 = vcmp.eq.s32.totalorder %v49, 8
    %vm478 = vcmp.eq.s32.totalorder %v50, 8
    %vm479 = vmor %vm53, %vm477
    %vm480 = vmor %vm54, %vm478
    %vm481 = vcmp.eq.s32.totalorder %v49, 7
    %vm482 = vcmp.eq.s32.totalorder %v50, 7
    %vm483 = vmor %vm481, %vm65
    %vm484 = vmor %vm482, %vm66
    %v485 = vpack.c.bf16 %v475, %v473
    %v486 = vrot.slane %v473, 7
    %v487 = vrot.slane %v475, 7
    %v488 = vsel %vm83, %v486, %v487
    %v489 = vsel %vm83, %v487, %v486
    %v490 = vsel %vm479, 1, 0
    %v491 = vsel %vm480, 1, 0
    %vm492 = vcmp.eq.s32.totalorder %v490, 1
    %vm493 = vcmp.eq.s32.totalorder %v491, 1
    %v494 = vsel %vm492, 0.0, %v489
    %v495 = vsel %vm493, 0.0, %v488
    %v496 = vpack.c.bf16 %v495, %v494
    %v497 = vrot.slane %v473, 1
    %v498 = vrot.slane %v475, 1
    %v499 = vsel %vm106, %v497, %v498
    %v500 = vsel %vm106, %v498, %v497
    %v501 = vsel %vm483, 1, 0
    %v502 = vsel %vm484, 1, 0
    %vm503 = vcmp.eq.s32.totalorder %v501, 1
    %vm504 = vcmp.eq.s32.totalorder %v502, 1
    %v505 = vsel %vm503, 0.0, %v499
    %v506 = vsel %vm504, 0.0, %v500
    %v507 = vpack.c.bf16 %v506, %v505
    %s508 = scalar_lea.vmem [#allocation2], 96
    %v509 = vld [vmem:[%s508] sm:$0xf]
    %v510 = vld [vmem:[%s508 + $0x4] sm:$0xf]
    %v511 = vld [vmem:[%s508 + $0x8] sm:$0xf]
    %v512 = vld [vmem:[%s508 + $0xc] sm:$0xf]
    %v513 = vld [vmem:[%s508 + $0x10] sm:$0xf]
    %v514 = vld [vmem:[%s508 + $0x14] sm:$0xf]
    %v515 = vld [vmem:[%s508 + $0x18] sm:$0xf]
    %v516 = vld [vmem:[%s508 + $0x1c] sm:$0xf]
    %s517 = scalar_lea.vmem [#allocation2], 128
    %v518 = vld [vmem:[%s517] sm:$0xf]
    %v519 = vld [vmem:[%s517 + $0x4] sm:$0xf]
    %v520 = vld [vmem:[%s517 + $0x8] sm:$0xf]
    %v521 = vld [vmem:[%s517 + $0xc] sm:$0xf]
    %v522 = vld [vmem:[%s517 + $0x10] sm:$0xf]
    %v523 = vld [vmem:[%s517 + $0x14] sm:$0xf]
    %v524 = vld [vmem:[%s517 + $0x18] sm:$0xf]
    %v525 = vld [vmem:[%s517 + $0x1c] sm:$0xf]
    %v534 = vunpack.c.l.b16 %v518
    %v535 = vunpack.c.l.b16 %v519
    %v536 = vunpack.c.l.b16 %v520
    %v537 = vunpack.c.l.b16 %v521
    %v538 = vunpack.c.l.b16 %v522
    %v539 = vunpack.c.l.b16 %v523
    %v540 = vunpack.c.l.b16 %v524
    %v541 = vunpack.c.l.b16 %v525
    %v542 = vpack.c.b16 %v535, %v534
    %v543 = vpack.c.b16 %v537, %v536
    %v544 = vpack.c.b16 %v539, %v538
    %v545 = vpack.c.b16 %v541, %v540
    %v551 = vsel %vm166, %v485, 0
    %553 = vmatpush.bf16.msra.mxu0 0
    %554 = vmatpush.bf16.msra.mxu0 0
    %555 = vmatpush.bf16.msra.mxu0 0
    %556 = vmatpush.bf16.msra.mxu0 0
    %557 = vmatpush.bf16.msra.mxu0 %v545
    %558 = vmatpush.bf16.msra.mxu0 %v544
    %559 = vmatpush.bf16.msra.mxu0 %v543
    %560 = vmatpush.bf16.msra.mxu0 %v542
    %561 = vmatmul.bf16.gmra.mxu0 %v551
    %v562 = vpop.f32.mrf.mxu0
    %v563 = vadd.f32 0.0, %v562
    %v564 = vpop.f32.mrf.mxu0
    %v565 = vadd.f32 0.0, %v564
    %566 = vdwg.mxu0
    %v575 = vunpack.c.l.b16 %v509
    %v576 = vunpack.c.l.b16 %v510
    %v577 = vunpack.c.l.b16 %v511
    %v578 = vunpack.c.l.b16 %v512
    %v579 = vunpack.c.l.b16 %v513
    %v580 = vunpack.c.l.b16 %v514
    %v581 = vunpack.c.l.b16 %v515
    %v582 = vunpack.c.l.b16 %v516
    %v583 = vpack.c.b16 %v576, %v575
    %v584 = vpack.c.b16 %v578, %v577
    %v585 = vpack.c.b16 %v580, %v579
    %v586 = vpack.c.b16 %v582, %v581
    %v592 = vsel %vm166, %v496, 0
    %594 = vmatpush.bf16.msra.mxu0 0
    %595 = vmatpush.bf16.msra.mxu0 0
    %596 = vmatpush.bf16.msra.mxu0 0
    %597 = vmatpush.bf16.msra.mxu0 0
    %598 = vmatpush.bf16.msra.mxu0 %v586
    %599 = vmatpush.bf16.msra.mxu0 %v585
    %600 = vmatpush.bf16.msra.mxu0 %v584
    %601 = vmatpush.bf16.msra.mxu0 %v583
    %602 = vmatmul.bf16.gmra.mxu0 %v592
    %v603 = vpop.f32.mrf.mxu0
    %v604 = vadd.f32 %v563, %v603
    %v605 = vpop.f32.mrf.mxu0
    %v606 = vadd.f32 %v565, %v605
    %607 = vdwg.mxu0
    %s608 = scalar_lea.vmem [#allocation2], 160
    %v609 = vld [vmem:[%s608] sm:$0xf]
    %v610 = vld [vmem:[%s608 + $0x4] sm:$0xf]
    %v611 = vld [vmem:[%s608 + $0x8] sm:$0xf]
    %v612 = vld [vmem:[%s608 + $0xc] sm:$0xf]
    %v613 = vld [vmem:[%s608 + $0x10] sm:$0xf]
    %v614 = vld [vmem:[%s608 + $0x14] sm:$0xf]
    %v615 = vld [vmem:[%s608 + $0x18] sm:$0xf]
    %v616 = vld [vmem:[%s608 + $0x1c] sm:$0xf]
    %v625 = vunpack.c.l.b16 %v609
    %v626 = vunpack.c.l.b16 %v610
    %v627 = vunpack.c.l.b16 %v611
    %v628 = vunpack.c.l.b16 %v612
    %v629 = vunpack.c.l.b16 %v613
    %v630 = vunpack.c.l.b16 %v614
    %v631 = vunpack.c.l.b16 %v615
    %v632 = vunpack.c.l.b16 %v616
    %v633 = vpack.c.b16 %v626, %v625
    %v634 = vpack.c.b16 %v628, %v627
    %v635 = vpack.c.b16 %v630, %v629
    %v636 = vpack.c.b16 %v632, %v631
    %v642 = vsel %vm166, %v507, 0
    %644 = vmatpush.bf16.msra.mxu0 0
    %645 = vmatpush.bf16.msra.mxu0 0
    %646 = vmatpush.bf16.msra.mxu0 0
    %647 = vmatpush.bf16.msra.mxu0 0
    %648 = vmatpush.bf16.msra.mxu0 %v636
    %649 = vmatpush.bf16.msra.mxu0 %v635
    %650 = vmatpush.bf16.msra.mxu0 %v634
    %651 = vmatpush.bf16.msra.mxu0 %v633
    %652 = vmatmul.bf16.gmra.mxu0 %v642
    %v653 = vpop.f32.mrf.mxu0
    %v654 = vadd.f32 0.0, %v653
    %v655 = vpop.f32.mrf.mxu0
    %v656 = vadd.f32 0.0, %v655
    %657 = vdwg.mxu0
    %v658 = vadd.f32 %v604, %v654
    %v659 = vadd.f32 %v606, %v656
    %s660 = scalar_lea.vmem %s2, 1
    %v661 = vld [vmem:[%s660] sm:$0x1]
    %v663 = vperm.slane %v661, 0
    %v665 = vadd.f32 %v658, %v663
    %v666 = vadd.f32 %v659, %v663
    %v667 = vmax.f32 %v665, 0.0
    %v668 = vmax.f32 %v666, 0.0
    %v669 = vpack.c.bf16 %v668, %v667
    %v670 = vrot.slane %v667, 7
    %v671 = vrot.slane %v668, 7
    %v672 = vsel %vm83, %v670, %v671
    %v673 = vsel %vm83, %v671, %v670
    %v674 = vsel %vm492, 0.0, %v673
    %v675 = vsel %vm493, 0.0, %v672
    %v676 = vpack.c.bf16 %v675, %v674
    %v677 = vrot.slane %v667, 1
    %v678 = vrot.slane %v668, 1
    %v679 = vsel %vm106, %v677, %v678
    %v680 = vsel %vm106, %v678, %v677
    %v681 = vsel %vm503, 0.0, %v679
    %v682 = vsel %vm504, 0.0, %v680
    %v683 = vpack.c.bf16 %v682, %v681
    %s684 = scalar_lea.vmem [#allocation2], 192
    %v685 = vld [vmem:[%s684] sm:$0xf]
    %v686 = vld [vmem:[%s684 + $0x4] sm:$0xf]
    %v687 = vld [vmem:[%s684 + $0x8] sm:$0xf]
    %v688 = vld [vmem:[%s684 + $0xc] sm:$0xf]
    %v689 = vld [vmem:[%s684 + $0x10] sm:$0xf]
    %v690 = vld [vmem:[%s684 + $0x14] sm:$0xf]
    %v691 = vld [vmem:[%s684 + $0x18] sm:$0xf]
    %v692 = vld [vmem:[%s684 + $0x1c] sm:$0xf]
    %s693 = scalar_lea.vmem [#allocation2], 224
    %v694 = vld [vmem:[%s693] sm:$0xf]
    %v695 = vld [vmem:[%s693 + $0x4] sm:$0xf]
    %v696 = vld [vmem:[%s693 + $0x8] sm:$0xf]
    %v697 = vld [vmem:[%s693 + $0xc] sm:$0xf]
    %v698 = vld [vmem:[%s693 + $0x10] sm:$0xf]
    %v699 = vld [vmem:[%s693 + $0x14] sm:$0xf]
    %v700 = vld [vmem:[%s693 + $0x18] sm:$0xf]
    %v701 = vld [vmem:[%s693 + $0x1c] sm:$0xf]
    %v710 = vunpack.c.l.b16 %v694
    %v711 = vunpack.c.l.b16 %v695
    %v712 = vunpack.c.l.b16 %v696
    %v713 = vunpack.c.l.b16 %v697
    %v714 = vunpack.c.l.b16 %v698
    %v715 = vunpack.c.l.b16 %v699
    %v716 = vunpack.c.l.b16 %v700
    %v717 = vunpack.c.l.b16 %v701
    %v718 = vpack.c.b16 %v711, %v710
    %v719 = vpack.c.b16 %v713, %v712
    %v720 = vpack.c.b16 %v715, %v714
    %v721 = vpack.c.b16 %v717, %v716
    %v727 = vsel %vm166, %v669, 0
    %729 = vmatpush.bf16.msra.mxu0 0
    %730 = vmatpush.bf16.msra.mxu0 0
    %731 = vmatpush.bf16.msra.mxu0 0
    %732 = vmatpush.bf16.msra.mxu0 0
    %733 = vmatpush.bf16.msra.mxu0 %v721
    %734 = vmatpush.bf16.msra.mxu0 %v720
    %735 = vmatpush.bf16.msra.mxu0 %v719
    %736 = vmatpush.bf16.msra.mxu0 %v718
    %737 = vmatmul.bf16.gmra.mxu0 %v727
    %v738 = vpop.f32.mrf.mxu0
    %v739 = vadd.f32 0.0, %v738
    %v740 = vpop.f32.mrf.mxu0
    %v741 = vadd.f32 0.0, %v740
    %742 = vdwg.mxu0
    %v751 = vunpack.c.l.b16 %v685
    %v752 = vunpack.c.l.b16 %v686
    %v753 = vunpack.c.l.b16 %v687
    %v754 = vunpack.c.l.b16 %v688
    %v755 = vunpack.c.l.b16 %v689
    %v756 = vunpack.c.l.b16 %v690
    %v757 = vunpack.c.l.b16 %v691
    %v758 = vunpack.c.l.b16 %v692
    %v759 = vpack.c.b16 %v752, %v751
    %v760 = vpack.c.b16 %v754, %v753
    %v761 = vpack.c.b16 %v756, %v755
    %v762 = vpack.c.b16 %v758, %v757
    %v768 = vsel %vm166, %v676, 0
    %770 = vmatpush.bf16.msra.mxu0 0
    %771 = vmatpush.bf16.msra.mxu0 0
    %772 = vmatpush.bf16.msra.mxu0 0
    %773 = vmatpush.bf16.msra.mxu0 0
    %774 = vmatpush.bf16.msra.mxu0 %v762
    %775 = vmatpush.bf16.msra.mxu0 %v761
    %776 = vmatpush.bf16.msra.mxu0 %v760
    %777 = vmatpush.bf16.msra.mxu0 %v759
    %778 = vmatmul.bf16.gmra.mxu0 %v768
    %v779 = vpop.f32.mrf.mxu0
    %v780 = vadd.f32 %v739, %v779
    %v781 = vpop.f32.mrf.mxu0
    %v782 = vadd.f32 %v741, %v781
    %783 = vdwg.mxu0
    %s784 = scalar_lea.vmem [#allocation2], 256
    %v785 = vld [vmem:[%s784] sm:$0xf]
    %v786 = vld [vmem:[%s784 + $0x4] sm:$0xf]
    %v787 = vld [vmem:[%s784 + $0x8] sm:$0xf]
    %v788 = vld [vmem:[%s784 + $0xc] sm:$0xf]
    %v789 = vld [vmem:[%s784 + $0x10] sm:$0xf]
    %v790 = vld [vmem:[%s784 + $0x14] sm:$0xf]
    %v791 = vld [vmem:[%s784 + $0x18] sm:$0xf]
    %v792 = vld [vmem:[%s784 + $0x1c] sm:$0xf]
    %v801 = vunpack.c.l.b16 %v785
    %v802 = vunpack.c.l.b16 %v786
    %v803 = vunpack.c.l.b16 %v787
    %v804 = vunpack.c.l.b16 %v788
    %v805 = vunpack.c.l.b16 %v789
    %v806 = vunpack.c.l.b16 %v790
    %v807 = vunpack.c.l.b16 %v791
    %v808 = vunpack.c.l.b16 %v792
    %v809 = vpack.c.b16 %v802, %v801
    %v810 = vpack.c.b16 %v804, %v803
    %v811 = vpack.c.b16 %v806, %v805
    %v812 = vpack.c.b16 %v808, %v807
    %v818 = vsel %vm166, %v683, 0
    %820 = vmatpush.bf16.msra.mxu0 0
    %821 = vmatpush.bf16.msra.mxu0 0
    %822 = vmatpush.bf16.msra.mxu0 0
    %823 = vmatpush.bf16.msra.mxu0 0
    %824 = vmatpush.bf16.msra.mxu0 %v812
    %825 = vmatpush.bf16.msra.mxu0 %v811
    %826 = vmatpush.bf16.msra.mxu0 %v810
    %827 = vmatpush.bf16.msra.mxu0 %v809
    %828 = vmatmul.bf16.gmra.mxu0 %v818
    %v829 = vpop.f32.mrf.mxu0
    %v830 = vadd.f32 0.0, %v829
    %v831 = vpop.f32.mrf.mxu0
    %v832 = vadd.f32 0.0, %v831
    %833 = vdwg.mxu0
    %v834 = vadd.f32 %v780, %v830
    %v835 = vadd.f32 %v782, %v832
    %s836 = scalar_lea.vmem %s2, 2
    %v837 = vld [vmem:[%s836] sm:$0x1]
    %v839 = vperm.slane %v837, 0
    %v841 = vadd.f32 %v834, %v839
    %v842 = vadd.f32 %v835, %v839
    %v843 = vmax.f32 %v841, 0.0
    %v844 = vmax.f32 %v842, 0.0
    %v845 = vadd.f32 %v473, %v843
    %v846 = vadd.f32 %v475, %v844
    %v847 = vpack.c.bf16 %v846, %v845
    %v848 = vrot.slane %v845, 7
    %v849 = vrot.slane %v846, 7
    %v850 = vsel %vm83, %v848, %v849
    %v851 = vsel %vm83, %v849, %v848
    %v852 = vsel %vm492, 0.0, %v851
    %v853 = vsel %vm493, 0.0, %v850
    %v854 = vpack.c.bf16 %v853, %v852
    %v855 = vrot.slane %v845, 1
    %v856 = vrot.slane %v846, 1
    %v857 = vsel %vm106, %v855, %v856
    %v858 = vsel %vm106, %v856, %v855
    %v859 = vsel %vm503, 0.0, %v857
    %v860 = vsel %vm504, 0.0, %v858
    %v861 = vpack.c.bf16 %v860, %v859
    %s862 = scalar_lea.vmem [#allocation2], 288
    %v863 = vld [vmem:[%s862] sm:$0xf]
    %v864 = vld [vmem:[%s862 + $0x4] sm:$0xf]
    %v865 = vld [vmem:[%s862 + $0x8] sm:$0xf]
    %v866 = vld [vmem:[%s862 + $0xc] sm:$0xf]
    %v867 = vld [vmem:[%s862 + $0x10] sm:$0xf]
    %v868 = vld [vmem:[%s862 + $0x14] sm:$0xf]
    %v869 = vld [vmem:[%s862 + $0x18] sm:$0xf]
    %v870 = vld [vmem:[%s862 + $0x1c] sm:$0xf]
    %s871 = scalar_lea.vmem [#allocation2], 320
    %v872 = vld [vmem:[%s871] sm:$0xf]
    %v873 = vld [vmem:[%s871 + $0x4] sm:$0xf]
    %v874 = vld [vmem:[%s871 + $0x8] sm:$0xf]
    %v875 = vld [vmem:[%s871 + $0xc] sm:$0xf]
    %v876 = vld [vmem:[%s871 + $0x10] sm:$0xf]
    %v877 = vld [vmem:[%s871 + $0x14] sm:$0xf]
    %v878 = vld [vmem:[%s871 + $0x18] sm:$0xf]
    %v879 = vld [vmem:[%s871 + $0x1c] sm:$0xf]
    %v888 = vunpack.c.l.b16 %v872
    %v889 = vunpack.c.l.b16 %v873
    %v890 = vunpack.c.l.b16 %v874
    %v891 = vunpack.c.l.b16 %v875
    %v892 = vunpack.c.l.b16 %v876
    %v893 = vunpack.c.l.b16 %v877
    %v894 = vunpack.c.l.b16 %v878
    %v895 = vunpack.c.l.b16 %v879
    %v896 = vpack.c.b16 %v889, %v888
    %v897 = vpack.c.b16 %v891, %v890
    %v898 = vpack.c.b16 %v893, %v892
    %v899 = vpack.c.b16 %v895, %v894
    %v905 = vsel %vm166, %v847, 0
    %907 = vmatpush.bf16.msra.mxu0 0
    %908 = vmatpush.bf16.msra.mxu0 0
    %909 = vmatpush.bf16.msra.mxu0 0
    %910 = vmatpush.bf16.msra.mxu0 0
    %911 = vmatpush.bf16.msra.mxu0 %v899
    %912 = vmatpush.bf16.msra.mxu0 %v898
    %913 = vmatpush.bf16.msra.mxu0 %v897
    %914 = vmatpush.bf16.msra.mxu0 %v896
    %915 = vmatmul.bf16.gmra.mxu0 %v905
    %v916 = vpop.f32.mrf.mxu0
    %v917 = vadd.f32 0.0, %v916
    %v918 = vpop.f32.mrf.mxu0
    %v919 = vadd.f32 0.0, %v918
    %920 = vdwg.mxu0
    %v929 = vunpack.c.l.b16 %v863
    %v930 = vunpack.c.l.b16 %v864
    %v931 = vunpack.c.l.b16 %v865
    %v932 = vunpack.c.l.b16 %v866
    %v933 = vunpack.c.l.b16 %v867
    %v934 = vunpack.c.l.b16 %v868
    %v935 = vunpack.c.l.b16 %v869
    %v936 = vunpack.c.l.b16 %v870
    %v937 = vpack.c.b16 %v930, %v929
    %v938 = vpack.c.b16 %v932, %v931
    %v939 = vpack.c.b16 %v934, %v933
    %v940 = vpack.c.b16 %v936, %v935
    %v946 = vsel %vm166, %v854, 0
    %948 = vmatpush.bf16.msra.mxu0 0
    %949 = vmatpush.bf16.msra.mxu0 0
    %950 = vmatpush.bf16.msra.mxu0 0
    %951 = vmatpush.bf16.msra.mxu0 0
    %952 = vmatpush.bf16.msra.mxu0 %v940
    %953 = vmatpush.bf16.msra.mxu0 %v939
    %954 = vmatpush.bf16.msra.mxu0 %v938
    %955 = vmatpush.bf16.msra.mxu0 %v937
    %956 = vmatmul.bf16.gmra.mxu0 %v946
    %v957 = vpop.f32.mrf.mxu0
    %v958 = vadd.f32 %v917, %v957
    %v959 = vpop.f32.mrf.mxu0
    %v960 = vadd.f32 %v919, %v959
    %961 = vdwg.mxu0
    %s962 = scalar_lea.vmem [#allocation2], 352
    %v963 = vld [vmem:[%s962] sm:$0xf]
    %v964 = vld [vmem:[%s962 + $0x4] sm:$0xf]
    %v965 = vld [vmem:[%s962 + $0x8] sm:$0xf]
    %v966 = vld [vmem:[%s962 + $0xc] sm:$0xf]
    %v967 = vld [vmem:[%s962 + $0x10] sm:$0xf]
    %v968 = vld [vmem:[%s962 + $0x14] sm:$0xf]
    %v969 = vld [vmem:[%s962 + $0x18] sm:$0xf]
    %v970 = vld [vmem:[%s962 + $0x1c] sm:$0xf]
    %v979 = vunpack.c.l.b16 %v963
    %v980 = vunpack.c.l.b16 %v964
    %v981 = vunpack.c.l.b16 %v965
    %v982 = vunpack.c.l.b16 %v966
    %v983 = vunpack.c.l.b16 %v967
    %v984 = vunpack.c.l.b16 %v968
    %v985 = vunpack.c.l.b16 %v969
    %v986 = vunpack.c.l.b16 %v970
    %v987 = vpack.c.b16 %v980, %v979
    %v988 = vpack.c.b16 %v982, %v981
    %v989 = vpack.c.b16 %v984, %v983
    %v990 = vpack.c.b16 %v986, %v985
    %v996 = vsel %vm166, %v861, 0
    %998 = vmatpush.bf16.msra.mxu0 0
    %999 = vmatpush.bf16.msra.mxu0 0
    %1000 = vmatpush.bf16.msra.mxu0 0
    %1001 = vmatpush.bf16.msra.mxu0 0
    %1002 = vmatpush.bf16.msra.mxu0 %v990
    %1003 = vmatpush.bf16.msra.mxu0 %v989
    %1004 = vmatpush.bf16.msra.mxu0 %v988
    %1005 = vmatpush.bf16.msra.mxu0 %v987
    %1006 = vmatmul.bf16.gmra.mxu0 %v996
    %v1007 = vpop.f32.mrf.mxu0
    %v1008 = vadd.f32 0.0, %v1007
    %v1009 = vpop.f32.mrf.mxu0
    %v1010 = vadd.f32 0.0, %v1009
    %1011 = vdwg.mxu0
    %v1012 = vadd.f32 %v958, %v1008
    %v1013 = vadd.f32 %v960, %v1010
    %s1014 = scalar_lea.vmem %s2, 3
    %v1015 = vld [vmem:[%s1014] sm:$0x1]
    %v1017 = vperm.slane %v1015, 0
    %v1019 = vadd.f32 %v1012, %v1017
    %v1020 = vadd.f32 %v1013, %v1017
    %v1021 = vmax.f32 %v1019, 0.0
    %v1022 = vmax.f32 %v1020, 0.0
    %v1023 = vrot.slane %v1021, 7
    %v1024 = vrot.slane %v1022, 7
    %v1025 = vsel %vm83, %v1023, %v1024
    %v1026 = vsel %vm83, %v1024, %v1023
    %v1027 = vsel %vm492, 0.0, %v1026
    %v1028 = vsel %vm493, 0.0, %v1025
    %v1029 = vrot.slane %v1021, 1
    %v1030 = vrot.slane %v1022, 1
    %v1031 = vsel %vm106, %v1029, %v1030
    %v1032 = vsel %vm106, %v1030, %v1029
    %v1033 = vsel %vm503, 0.0, %v1031
    %v1034 = vsel %vm504, 0.0, %v1032
    %v1035 = vmax.f32 %v1027, %v1033
    %v1036 = vmax.f32 %v1028, %v1034
    %v1037 = vmax.f32 %v1021, %v1035
    %v1038 = vmax.f32 %v1022, %v1036
    %s1039 = scalar_lea.vmem %s3, 8
    %v1040 = vld [vmem:[%s1039] sm:$0xf]
    %v1041 = vpack.c.bf16 %v1038, %v1037
    %vm1042 = vcmask 130048
    %v1044 = vsel %vm1042, %v1040, 0
    %1046 = vmatpush.bf16.msra.mxu0 0
    %1047 = vmatpush.bf16.msra.mxu0 0
    %1048 = vmatpush.bf16.msra.mxu0 0
    %1049 = vmatpush.bf16.msra.mxu0 0
    %1050 = vmatpush.bf16.msra.mxu0 0
    %1051 = vmatpush.bf16.msra.mxu0 0
    %1052 = vmatpush.bf16.msra.mxu0 0
    %1053 = vmatpush.bf16.msra.mxu0 %v1041
    %1054 = vmatmul.bf16.gmra.mxu0 %v1044
    %v1055 = vpop.f32.mrf.mxu0
    %v1056 = vadd.f32 0.0, %v1055
    %v1057 = vpop.f32.mrf.mxu0
    %1058 = vdwg.mxu0
    %vm1059 = vcmp.lt.s32.totalorder %v375, 16
    %1060 = vrot.lane.b32.xlu0 %v1056, 16
    %v1061 = vpop.permute.xlu0 %1060
    %v1062 = vsel %vm1059, 1, 0
    %vm1063 = vcmp.eq.s32.totalorder %v1062, 1
    %v1064 = vsel %vm1063, 0.0, %v1061
    %vm1065 = vcmp.ge.s32.totalorder %v375, 112
    %1066 = vrot.lane.b32.xlu0 %v1056, 112
    %v1067 = vpop.permute.xlu0 %1066
    %v1068 = vsel %vm1065, 1, 0
    %vm1069 = vcmp.eq.s32.totalorder %v1068, 1
    %v1070 = vsel %vm1069, 0.0, %v1067
    %v1071 = vmax.f32 %v1064, %v1070
    %v1072 = vmax.f32 %v1056, %v1071
    %v1073 = vpack.c.bf16 %v1072, %v1072
    %s1074 = scalar_lea.vmem %s4, 64
    %v1075 = vld [vmem:[%s1074] sm:$0xf]
    %v1076 = vld [vmem:[%s1074 + $0x4] sm:$0xf]
    %v1077 = vld [vmem:[%s1074 + $0x8] sm:$0xf]
    %v1078 = vld [vmem:[%s1074 + $0xc] sm:$0xf]
    %v1079 = vld [vmem:[%s1074 + $0x10] sm:$0xf]
    %v1080 = vld [vmem:[%s1074 + $0x14] sm:$0xf]
    %v1081 = vld [vmem:[%s1074 + $0x18] sm:$0xf]
    %v1082 = vld [vmem:[%s1074 + $0x1c] sm:$0xf]
    %v1083 = vld [vmem:[%s1074 + $0x20] sm:$0xf]
    %v1084 = vld [vmem:[%s1074 + $0x24] sm:$0xf]
    %v1085 = vld [vmem:[%s1074 + $0x28] sm:$0xf]
    %v1086 = vld [vmem:[%s1074 + $0x2c] sm:$0xf]
    %v1087 = vld [vmem:[%s1074 + $0x30] sm:$0xf]
    %v1088 = vld [vmem:[%s1074 + $0x34] sm:$0xf]
    %v1089 = vld [vmem:[%s1074 + $0x38] sm:$0xf]
    %v1090 = vld [vmem:[%s1074 + $0x3c] sm:$0xf]
    %v1107 = vunpack.c.l.b16 %v1075
    %v1108 = vunpack.c.l.b16 %v1076
    %v1109 = vunpack.c.l.b16 %v1077
    %v1110 = vunpack.c.l.b16 %v1078
    %v1111 = vunpack.c.l.b16 %v1079
    %v1112 = vunpack.c.l.b16 %v1080
    %v1113 = vunpack.c.l.b16 %v1081
    %v1114 = vunpack.c.l.b16 %v1082
    %v1115 = vunpack.c.l.b16 %v1083
    %v1116 = vunpack.c.l.b16 %v1084
    %v1117 = vunpack.c.l.b16 %v1085
    %v1118 = vunpack.c.l.b16 %v1086
    %v1119 = vunpack.c.l.b16 %v1087
    %v1120 = vunpack.c.l.b16 %v1088
    %v1121 = vunpack.c.l.b16 %v1089
    %v1122 = vunpack.c.l.b16 %v1090
    %v1123 = vpack.c.b16 %v1108, %v1107
    %v1124 = vpack.c.b16 %v1110, %v1109
    %v1125 = vpack.c.b16 %v1112, %v1111
    %v1126 = vpack.c.b16 %v1114, %v1113
    %v1127 = vpack.c.b16 %v1116, %v1115
    %v1128 = vpack.c.b16 %v1118, %v1117
    %v1129 = vpack.c.b16 %v1120, %v1119
    %v1130 = vpack.c.b16 %v1122, %v1121
    %1139 = vmatpush.bf16.msra.mxu0 %v1130
    %1140 = vmatpush.bf16.msra.mxu0 %v1129
    %1141 = vmatpush.bf16.msra.mxu0 %v1128
    %1142 = vmatpush.bf16.msra.mxu0 %v1127
    %1143 = vmatpush.bf16.msra.mxu0 %v1126
    %1144 = vmatpush.bf16.msra.mxu0 %v1125
    %1145 = vmatpush.bf16.msra.mxu0 %v1124
    %1146 = vmatpush.bf16.msra.mxu0 %v1123
    %1147 = vmatmul.bf16.gmra.mxu0 %v1073
    %v1148 = vpop.f32.mrf.mxu0
    %v1149 = vadd.f32 0.0, %v1148
    %v1150 = vpop.f32.mrf.mxu0
    %1151 = vdwg.mxu0
    %vm1152 = vcmp.eq.s32.totalorder %v49, 4
    %vm1153 = vmor %vm53, %vm1152
    %vm1154 = vcmp.eq.s32.totalorder %v49, 3
    %vm1155 = vmor %vm1154, %vm481
    %v1156 = vpack.c.bf16 %v1149, %v1149
    %v1157 = vrot.slane %v1149, 7
    %v1158 = vsel %vm1153, 1, 0
    %vm1159 = vcmp.eq.s32.totalorder %v1158, 1
    %v1160 = vsel %vm1159, 0.0, %v1157
    %v1161 = vpack.c.bf16 %v1160, %v1160
    %v1162 = vrot.slane %v1149, 1
    %v1163 = vsel %vm1155, 1, 0
    %vm1164 = vcmp.eq.s32.totalorder %v1163, 1
    %v1165 = vsel %vm1164, 0.0, %v1162
    %v1166 = vpack.c.bf16 %v1165, %v1165
    %s1167 = scalar_lea.vmem [#allocation2], 384
    %v1168 = vld [vmem:[%s1167] sm:$0xf]
    %v1169 = vld [vmem:[%s1167 + $0x4] sm:$0xf]
    %v1170 = vld [vmem:[%s1167 + $0x8] sm:$0xf]
    %v1171 = vld [vmem:[%s1167 + $0xc] sm:$0xf]
    %v1172 = vld [vmem:[%s1167 + $0x10] sm:$0xf]
    %v1173 = vld [vmem:[%s1167 + $0x14] sm:$0xf]
    %v1174 = vld [vmem:[%s1167 + $0x18] sm:$0xf]
    %v1175 = vld [vmem:[%s1167 + $0x1c] sm:$0xf]
    %s1176 = scalar_lea.vmem [#allocation2], 416
    %v1177 = vld [vmem:[%s1176] sm:$0xf]
    %v1178 = vld [vmem:[%s1176 + $0x4] sm:$0xf]
    %v1179 = vld [vmem:[%s1176 + $0x8] sm:$0xf]
    %v1180 = vld [vmem:[%s1176 + $0xc] sm:$0xf]
    %v1181 = vld [vmem:[%s1176 + $0x10] sm:$0xf]
    %v1182 = vld [vmem:[%s1176 + $0x14] sm:$0xf]
    %v1183 = vld [vmem:[%s1176 + $0x18] sm:$0xf]
    %v1184 = vld [vmem:[%s1176 + $0x1c] sm:$0xf]
    %v1193 = vunpack.c.l.b16 %v1177
    %v1194 = vunpack.c.l.b16 %v1178
    %v1195 = vunpack.c.l.b16 %v1179
    %v1196 = vunpack.c.l.b16 %v1180
    %v1197 = vunpack.c.l.b16 %v1181
    %v1198 = vunpack.c.l.b16 %v1182
    %v1199 = vunpack.c.l.b16 %v1183
    %v1200 = vunpack.c.l.b16 %v1184
    %v1201 = vpack.c.b16 %v1194, %v1193
    %v1202 = vpack.c.b16 %v1196, %v1195
    %v1203 = vpack.c.b16 %v1198, %v1197
    %v1204 = vpack.c.b16 %v1200, %v1199
    %v1210 = vsel %vm166, %v1156, 0
    %1212 = vmatpush.bf16.msra.mxu0 0
    %1213 = vmatpush.bf16.msra.mxu0 0
    %1214 = vmatpush.bf16.msra.mxu0 0
    %1215 = vmatpush.bf16.msra.mxu0 0
    %1216 = vmatpush.bf16.msra.mxu0 %v1204
    %1217 = vmatpush.bf16.msra.mxu0 %v1203
    %1218 = vmatpush.bf16.msra.mxu0 %v1202
    %1219 = vmatpush.bf16.msra.mxu0 %v1201
    %1220 = vmatmul.bf16.gmra.mxu0 %v1210
    %v1221 = vpop.f32.mrf.mxu0
    %v1222 = vadd.f32 0.0, %v1221
    %v1223 = vpop.f32.mrf.mxu0
    %1224 = vdwg.mxu0
    %v1233 = vunpack.c.l.b16 %v1168
    %v1234 = vunpack.c.l.b16 %v1169
    %v1235 = vunpack.c.l.b16 %v1170
    %v1236 = vunpack.c.l.b16 %v1171
    %v1237 = vunpack.c.l.b16 %v1172
    %v1238 = vunpack.c.l.b16 %v1173
    %v1239 = vunpack.c.l.b16 %v1174
    %v1240 = vunpack.c.l.b16 %v1175
    %v1241 = vpack.c.b16 %v1234, %v1233
    %v1242 = vpack.c.b16 %v1236, %v1235
    %v1243 = vpack.c.b16 %v1238, %v1237
    %v1244 = vpack.c.b16 %v1240, %v1239
    %v1250 = vsel %vm166, %v1161, 0
    %1252 = vmatpush.bf16.msra.mxu0 0
    %1253 = vmatpush.bf16.msra.mxu0 0
    %1254 = vmatpush.bf16.msra.mxu0 0
    %1255 = vmatpush.bf16.msra.mxu0 0
    %1256 = vmatpush.bf16.msra.mxu0 %v1244
    %1257 = vmatpush.bf16.msra.mxu0 %v1243
    %1258 = vmatpush.bf16.msra.mxu0 %v1242
    %1259 = vmatpush.bf16.msra.mxu0 %v1241
    %1260 = vmatmul.bf16.gmra.mxu0 %v1250
    %v1261 = vpop.f32.mrf.mxu0
    %v1262 = vadd.f32 %v1222, %v1261
    %v1263 = vpop.f32.mrf.mxu0
    %1264 = vdwg.mxu0
    %s1265 = scalar_lea.vmem [#allocation2], 448
    %v1266 = vld [vmem:[%s1265] sm:$0xf]
    %v1267 = vld [vmem:[%s1265 + $0x4] sm:$0xf]
    %v1268 = vld [vmem:[%s1265 + $0x8] sm:$0xf]
    %v1269 = vld [vmem:[%s1265 + $0xc] sm:$0xf]
    %v1270 = vld [vmem:[%s1265 + $0x10] sm:$0xf]
    %v1271 = vld [vmem:[%s1265 + $0x14] sm:$0xf]
    %v1272 = vld [vmem:[%s1265 + $0x18] sm:$0xf]
    %v1273 = vld [vmem:[%s1265 + $0x1c] sm:$0xf]
    %v1282 = vunpack.c.l.b16 %v1266
    %v1283 = vunpack.c.l.b16 %v1267
    %v1284 = vunpack.c.l.b16 %v1268
    %v1285 = vunpack.c.l.b16 %v1269
    %v1286 = vunpack.c.l.b16 %v1270
    %v1287 = vunpack.c.l.b16 %v1271
    %v1288 = vunpack.c.l.b16 %v1272
    %v1289 = vunpack.c.l.b16 %v1273
    %v1290 = vpack.c.b16 %v1283, %v1282
    %v1291 = vpack.c.b16 %v1285, %v1284
    %v1292 = vpack.c.b16 %v1287, %v1286
    %v1293 = vpack.c.b16 %v1289, %v1288
    %v1299 = vsel %vm166, %v1166, 0
    %1301 = vmatpush.bf16.msra.mxu0 0
    %1302 = vmatpush.bf16.msra.mxu0 0
    %1303 = vmatpush.bf16.msra.mxu0 0
    %1304 = vmatpush.bf16.msra.mxu0 0
    %1305 = vmatpush.bf16.msra.mxu0 %v1293
    %1306 = vmatpush.bf16.msra.mxu0 %v1292
    %1307 = vmatpush.bf16.msra.mxu0 %v1291
    %1308 = vmatpush.bf16.msra.mxu0 %v1290
    %1309 = vmatmul.bf16.gmra.mxu0 %v1299
    %v1310 = vpop.f32.mrf.mxu0
    %v1311 = vadd.f32 0.0, %v1310
    %v1312 = vpop.f32.mrf.mxu0
    %1313 = vdwg.mxu0
    %v1314 = vadd.f32 %v1262, %v1311
    %s1315 = scalar_lea.vmem %s2, 4
    %v1316 = vld [vmem:[%s1315] sm:$0x1]
    %v1318 = vperm.slane %v1316, 0
    %v1320 = vadd.f32 %v1314, %v1318
    %v1321 = vmax.f32 %v1320, 0.0
    %v1322 = vpack.c.bf16 %v1321, %v1321
    %v1323 = vrot.slane %v1321, 7
    %v1324 = vsel %vm1159, 0.0, %v1323
    %v1325 = vpack.c.bf16 %v1324, %v1324
    %v1326 = vrot.slane %v1321, 1
    %v1327 = vsel %vm1164, 0.0, %v1326
    %v1328 = vpack.c.bf16 %v1327, %v1327
    %s1329 = scalar_lea.vmem [#allocation2], 480
    %v1330 = vld [vmem:[%s1329] sm:$0xf]
    %v1331 = vld [vmem:[%s1329 + $0x4] sm:$0xf]
    %v1332 = vld [vmem:[%s1329 + $0x8] sm:$0xf]
    %v1333 = vld [vmem:[%s1329 + $0xc] sm:$0xf]
    %v1334 = vld [vmem:[%s1329 + $0x10] sm:$0xf]
    %v1335 = vld [vmem:[%s1329 + $0x14] sm:$0xf]
    %v1336 = vld [vmem:[%s1329 + $0x18] sm:$0xf]
    %v1337 = vld [vmem:[%s1329 + $0x1c] sm:$0xf]
    %s1338 = scalar_lea.vmem [#allocation2], 512
    %v1339 = vld [vmem:[%s1338] sm:$0xf]
    %v1340 = vld [vmem:[%s1338 + $0x4] sm:$0xf]
    %v1341 = vld [vmem:[%s1338 + $0x8] sm:$0xf]
    %v1342 = vld [vmem:[%s1338 + $0xc] sm:$0xf]
    %v1343 = vld [vmem:[%s1338 + $0x10] sm:$0xf]
    %v1344 = vld [vmem:[%s1338 + $0x14] sm:$0xf]
    %v1345 = vld [vmem:[%s1338 + $0x18] sm:$0xf]
    %v1346 = vld [vmem:[%s1338 + $0x1c] sm:$0xf]
    %v1355 = vunpack.c.l.b16 %v1339
    %v1356 = vunpack.c.l.b16 %v1340
    %v1357 = vunpack.c.l.b16 %v1341
    %v1358 = vunpack.c.l.b16 %v1342
    %v1359 = vunpack.c.l.b16 %v1343
    %v1360 = vunpack.c.l.b16 %v1344
    %v1361 = vunpack.c.l.b16 %v1345
    %v1362 = vunpack.c.l.b16 %v1346
    %v1363 = vpack.c.b16 %v1356, %v1355
    %v1364 = vpack.c.b16 %v1358, %v1357
    %v1365 = vpack.c.b16 %v1360, %v1359
    %v1366 = vpack.c.b16 %v1362, %v1361
    %v1372 = vsel %vm166, %v1322, 0
    %1374 = vmatpush.bf16.msra.mxu0 0
    %1375 = vmatpush.bf16.msra.mxu0 0
    %1376 = vmatpush.bf16.msra.mxu0 0
    %1377 = vmatpush.bf16.msra.mxu0 0
    %1378 = vmatpush.bf16.msra.mxu0 %v1366
    %1379 = vmatpush.bf16.msra.mxu0 %v1365
    %1380 = vmatpush.bf16.msra.mxu0 %v1364
    %1381 = vmatpush.bf16.msra.mxu0 %v1363
    %1382 = vmatmul.bf16.gmra.mxu0 %v1372
    %v1383 = vpop.f32.mrf.mxu0
    %v1384 = vadd.f32 0.0, %v1383
    %v1385 = vpop.f32.mrf.mxu0
    %1386 = vdwg.mxu0
    %v1395 = vunpack.c.l.b16 %v1330
    %v1396 = vunpack.c.l.b16 %v1331
    %v1397 = vunpack.c.l.b16 %v1332
    %v1398 = vunpack.c.l.b16 %v1333
    %v1399 = vunpack.c.l.b16 %v1334
    %v1400 = vunpack.c.l.b16 %v1335
    %v1401 = vunpack.c.l.b16 %v1336
    %v1402 = vunpack.c.l.b16 %v1337
    %v1403 = vpack.c.b16 %v1396, %v1395
    %v1404 = vpack.c.b16 %v1398, %v1397
    %v1405 = vpack.c.b16 %v1400, %v1399
    %v1406 = vpack.c.b16 %v1402, %v1401
    %v1412 = vsel %vm166, %v1325, 0
    %1414 = vmatpush.bf16.msra.mxu0 0
    %1415 = vmatpush.bf16.msra.mxu0 0
    %1416 = vmatpush.bf16.msra.mxu0 0
    %1417 = vmatpush.bf16.msra.mxu0 0
    %1418 = vmatpush.bf16.msra.mxu0 %v1406
    %1419 = vmatpush.bf16.msra.mxu0 %v1405
    %1420 = vmatpush.bf16.msra.mxu0 %v1404
    %1421 = vmatpush.bf16.msra.mxu0 %v1403
    %1422 = vmatmul.bf16.gmra.mxu0 %v1412
    %v1423 = vpop.f32.mrf.mxu0
    %v1424 = vadd.f32 %v1384, %v1423
    %v1425 = vpop.f32.mrf.mxu0
    %1426 = vdwg.mxu0
    %s1427 = scalar_lea.vmem [#allocation2], 544
    %v1428 = vld [vmem:[%s1427] sm:$0xf]
    %v1429 = vld [vmem:[%s1427 + $0x4] sm:$0xf]
    %v1430 = vld [vmem:[%s1427 + $0x8] sm:$0xf]
    %v1431 = vld [vmem:[%s1427 + $0xc] sm:$0xf]
    %v1432 = vld [vmem:[%s1427 + $0x10] sm:$0xf]
    %v1433 = vld [vmem:[%s1427 + $0x14] sm:$0xf]
    %v1434 = vld [vmem:[%s1427 + $0x18] sm:$0xf]
    %v1435 = vld [vmem:[%s1427 + $0x1c] sm:$0xf]
    %v1444 = vunpack.c.l.b16 %v1428
    %v1445 = vunpack.c.l.b16 %v1429
    %v1446 = vunpack.c.l.b16 %v1430
    %v1447 = vunpack.c.l.b16 %v1431
    %v1448 = vunpack.c.l.b16 %v1432
    %v1449 = vunpack.c.l.b16 %v1433
    %v1450 = vunpack.c.l.b16 %v1434
    %v1451 = vunpack.c.l.b16 %v1435
    %v1452 = vpack.c.b16 %v1445, %v1444
    %v1453 = vpack.c.b16 %v1447, %v1446
    %v1454 = vpack.c.b16 %v1449, %v1448
    %v1455 = vpack.c.b16 %v1451, %v1450
    %v1461 = vsel %vm166, %v1328, 0
    %1463 = vmatpush.bf16.msra.mxu0 0
    %1464 = vmatpush.bf16.msra.mxu0 0
    %1465 = vmatpush.bf16.msra.mxu0 0
    %1466 = vmatpush.bf16.msra.mxu0 0
    %1467 = vmatpush.bf16.msra.mxu0 %v1455
    %1468 = vmatpush.bf16.msra.mxu0 %v1454
    %1469 = vmatpush.bf16.msra.mxu0 %v1453
    %1470 = vmatpush.bf16.msra.mxu0 %v1452
    %1471 = vmatmul.bf16.gmra.mxu0 %v1461
    %v1472 = vpop.f32.mrf.mxu0
    %v1473 = vadd.f32 0.0, %v1472
    %v1474 = vpop.f32.mrf.mxu0
    %1475 = vdwg.mxu0
    %v1476 = vadd.f32 %v1424, %v1473
    %s1477 = scalar_lea.vmem %s2, 5
    %v1478 = vld [vmem:[%s1477] sm:$0x1]
    %v1480 = vperm.slane %v1478, 0
    %v1482 = vadd.f32 %v1476, %v1480
    %v1483 = vmax.f32 %v1482, 0.0
    %v1484 = vadd.f32 %v1149, %v1483
    %v1485 = vpack.c.bf16 %v1484, %v1484
    %v1486 = vld [vmem:[%s5] sm:$0xf]
    %v1487 = vld [vmem:[%s5 + $0x4] sm:$0xf]
    %v1488 = vld [vmem:[%s5 + $0x8] sm:$0xf]
    %v1489 = vld [vmem:[%s5 + $0xc] sm:$0xf]
    %v1490 = vld [vmem:[%s5 + $0x10] sm:$0xf]
    %v1491 = vld [vmem:[%s5 + $0x14] sm:$0xf]
    %v1492 = vld [vmem:[%s5 + $0x18] sm:$0xf]
    %v1493 = vld [vmem:[%s5 + $0x1c] sm:$0xf]
    %v1502 = vunpack.c.l.b16 %v1486
    %v1503 = vunpack.c.l.b16 %v1487
    %v1504 = vunpack.c.l.b16 %v1488
    %v1505 = vunpack.c.l.b16 %v1489
    %v1506 = vunpack.c.l.b16 %v1490
    %v1507 = vunpack.c.l.b16 %v1491
    %v1508 = vunpack.c.l.b16 %v1492
    %v1509 = vunpack.c.l.b16 %v1493
    %v1510 = vpack.c.b16 %v1503, %v1502
    %v1511 = vpack.c.b16 %v1505, %v1504
    %v1512 = vpack.c.b16 %v1507, %v1506
    %v1513 = vpack.c.b16 %v1509, %v1508
    %v1519 = vsel %vm166, %v1485, 0
    %1521 = vmatpush.bf16.msra.mxu0 0
    %1522 = vmatpush.bf16.msra.mxu0 0
    %1523 = vmatpush.bf16.msra.mxu0 0
    %1524 = vmatpush.bf16.msra.mxu0 0
    %1525 = vmatpush.bf16.msra.mxu0 %v1513
    %1526 = vmatpush.bf16.msra.mxu0 %v1512
    %1527 = vmatpush.bf16.msra.mxu0 %v1511
    %1528 = vmatpush.bf16.msra.mxu0 %v1510
    %1529 = vmatmul.bf16.gmra.mxu0 %v1519
    %v1530 = vpop.f32.mrf.mxu0
    %v1531 = vadd.f32 0.0, %v1530
    %v1532 = vpop.f32.mrf.mxu0
    %1533 = vdwg.mxu0
    %v1534 = vsel %vm1159, %v1531, 0.0
    %v1535 = vadd.f32 %v1534, 0.0
    %vm1536 = vcmp.eq.s32.totalorder %v49, 1
    %vm1537 = vcmp.eq.s32.totalorder %v49, 5
    %vm1538 = vmor %vm1536, %vm1537
    %v1539 = vld [vmem:[%s5 + $0x20] sm:$0xf]
    %v1540 = vld [vmem:[%s5 + $0x24] sm:$0xf]
    %v1541 = vld [vmem:[%s5 + $0x28] sm:$0xf]
    %v1542 = vld [vmem:[%s5 + $0x2c] sm:$0xf]
    %v1543 = vld [vmem:[%s5 + $0x30] sm:$0xf]
    %v1544 = vld [vmem:[%s5 + $0x34] sm:$0xf]
    %v1545 = vld [vmem:[%s5 + $0x38] sm:$0xf]
    %v1546 = vld [vmem:[%s5 + $0x3c] sm:$0xf]
    %v1555 = vunpack.c.l.b16 %v1539
    %v1556 = vunpack.c.l.b16 %v1540
    %v1557 = vunpack.c.l.b16 %v1541
    %v1558 = vunpack.c.l.b16 %v1542
    %v1559 = vunpack.c.l.b16 %v1543
    %v1560 = vunpack.c.l.b16 %v1544
    %v1561 = vunpack.c.l.b16 %v1545
    %v1562 = vunpack.c.l.b16 %v1546
    %v1563 = vpack.c.b16 %v1556, %v1555
    %v1564 = vpack.c.b16 %v1558, %v1557
    %v1565 = vpack.c.b16 %v1560, %v1559
    %v1566 = vpack.c.b16 %v1562, %v1561
    %1571 = vmatpush.bf16.msra.mxu0 0
    %1572 = vmatpush.bf16.msra.mxu0 0
    %1573 = vmatpush.bf16.msra.mxu0 0
    %1574 = vmatpush.bf16.msra.mxu0 0
    %1575 = vmatpush.bf16.msra.mxu0 %v1566
    %1576 = vmatpush.bf16.msra.mxu0 %v1565
    %1577 = vmatpush.bf16.msra.mxu0 %v1564
    %1578 = vmatpush.bf16.msra.mxu0 %v1563
    %1579 = vmatmul.bf16.gmra.mxu0 %v1519
    %v1580 = vpop.f32.mrf.mxu0
    %v1581 = vadd.f32 0.0, %v1580
    %v1582 = vpop.f32.mrf.mxu0
    %1583 = vdwg.mxu0
    %v1584 = vsel %vm1538, 1, 0
    %vm1585 = vcmp.eq.s32.totalorder %v1584, 1
    %v1586 = vsel %vm1585, %v1581, 0.0
    %v1587 = vadd.f32 %v1535, %v1586
    %vm1588 = vcmp.eq.s32.totalorder %v49, 2
    %vm1589 = vcmp.eq.s32.totalorder %v49, 6
    %vm1590 = vmor %vm1588, %vm1589
    %v1591 = vld [vmem:[%s5 + $0x40] sm:$0xf]
    %v1592 = vld [vmem:[%s5 + $0x44] sm:$0xf]
    %v1593 = vld [vmem:[%s5 + $0x48] sm:$0xf]
    %v1594 = vld [vmem:[%s5 + $0x4c] sm:$0xf]
    %v1595 = vld [vmem:[%s5 + $0x50] sm:$0xf]
    %v1596 = vld [vmem:[%s5 + $0x54] sm:$0xf]
    %v1597 = vld [vmem:[%s5 + $0x58] sm:$0xf]
    %v1598 = vld [vmem:[%s5 + $0x5c] sm:$0xf]
    %v1607 = vunpack.c.l.b16 %v1591
    %v1608 = vunpack.c.l.b16 %v1592
    %v1609 = vunpack.c.l.b16 %v1593
    %v1610 = vunpack.c.l.b16 %v1594
    %v1611 = vunpack.c.l.b16 %v1595
    %v1612 = vunpack.c.l.b16 %v1596
    %v1613 = vunpack.c.l.b16 %v1597
    %v1614 = vunpack.c.l.b16 %v1598
    %v1615 = vpack.c.b16 %v1608, %v1607
    %v1616 = vpack.c.b16 %v1610, %v1609
    %v1617 = vpack.c.b16 %v1612, %v1611
    %v1618 = vpack.c.b16 %v1614, %v1613
    %1623 = vmatpush.bf16.msra.mxu0 0
    %1624 = vmatpush.bf16.msra.mxu0 0
    %1625 = vmatpush.bf16.msra.mxu0 0
    %1626 = vmatpush.bf16.msra.mxu0 0
    %1627 = vmatpush.bf16.msra.mxu0 %v1618
    %1628 = vmatpush.bf16.msra.mxu0 %v1617
    %1629 = vmatpush.bf16.msra.mxu0 %v1616
    %1630 = vmatpush.bf16.msra.mxu0 %v1615
    %1631 = vmatmul.bf16.gmra.mxu0 %v1519
    %v1632 = vpop.f32.mrf.mxu0
    %v1633 = vadd.f32 0.0, %v1632
    %v1634 = vpop.f32.mrf.mxu0
    %1635 = vdwg.mxu0
    %v1636 = vsel %vm1590, 1, 0
    %vm1637 = vcmp.eq.s32.totalorder %v1636, 1
    %v1638 = vsel %vm1637, %v1633, 0.0
    %v1639 = vadd.f32 %v1587, %v1638
    %v1640 = vld [vmem:[%s5 + $0x60] sm:$0xf]
    %v1641 = vld [vmem:[%s5 + $0x64] sm:$0xf]
    %v1642 = vld [vmem:[%s5 + $0x68] sm:$0xf]
    %v1643 = vld [vmem:[%s5 + $0x6c] sm:$0xf]
    %v1644 = vld [vmem:[%s5 + $0x70] sm:$0xf]
    %v1645 = vld [vmem:[%s5 + $0x74] sm:$0xf]
    %v1646 = vld [vmem:[%s5 + $0x78] sm:$0xf]
    %v1647 = vld [vmem:[%s5 + $0x7c] sm:$0xf]
    %v1656 = vunpack.c.l.b16 %v1640
    %v1657 = vunpack.c.l.b16 %v1641
    %v1658 = vunpack.c.l.b16 %v1642
    %v1659 = vunpack.c.l.b16 %v1643
    %v1660 = vunpack.c.l.b16 %v1644
    %v1661 = vunpack.c.l.b16 %v1645
    %v1662 = vunpack.c.l.b16 %v1646
    %v1663 = vunpack.c.l.b16 %v1647
    %v1664 = vpack.c.b16 %v1657, %v1656
    %v1665 = vpack.c.b16 %v1659, %v1658
    %v1666 = vpack.c.b16 %v1661, %v1660
    %v1667 = vpack.c.b16 %v1663, %v1662
    %1672 = vmatpush.bf16.msra.mxu0 0
    %1673 = vmatpush.bf16.msra.mxu0 0
    %1674 = vmatpush.bf16.msra.mxu0 0
    %1675 = vmatpush.bf16.msra.mxu0 0
    %1676 = vmatpush.bf16.msra.mxu0 %v1667
    %1677 = vmatpush.bf16.msra.mxu0 %v1666
    %1678 = vmatpush.bf16.msra.mxu0 %v1665
    %1679 = vmatpush.bf16.msra.mxu0 %v1664
    %1680 = vmatmul.bf16.gmra.mxu0 %v1519
    %v1681 = vpop.f32.mrf.mxu0
    %v1682 = vadd.f32 0.0, %v1681
    %v1683 = vpop.f32.mrf.mxu0
    %1684 = vdwg.mxu0
    %v1685 = vsel %vm1164, %v1682, 0.0
    %v1686 = vadd.f32 %v1639, %v1685
    %v1687 = vmul.u32 %v49, 4
    %vm1688 = vcmp.ge.s32.totalorder %v375, %v1687
    %v1689 = vadd.s32 %v49, 1
    %v1690 = vmul.u32 %v1689, 4
    %vm1691 = vcmp.lt.s32.totalorder %v375, %v1690
    %vm1692 = vmand %vm1688, %vm1691
    %v1693 = vsel %vm1692, 1.0, 0.0
    %v1694 = vld [vmem:[%s6] sm:$0x1]
    %v1696 = vperm.slane %v1694, 0
    %vm1698 = vcmask 64512
    %v1700 = vsel %vm1698, %v1693, 0
    %1702 = vmatpush.msra.mxu0 0.0
    %1703 = vmatpush.msra.mxu0 0.0
    %1704 = vmatpush.msra.mxu0 0.0
    %1705 = vmatpush.msra.mxu0 0.0
    %1706 = vmatpush.msra.mxu0 0.0
    %1707 = vmatpush.msra.mxu0 0.0
    %1708 = vmatpush.msra.mxu0 0.0
    %1709 = vmatpush.msra.mxu0 0.0
    %1710 = vmatpush.msra.mxu0 0.0
    %1711 = vmatpush.msra.mxu0 0.0
    %1712 = vmatpush.msra.mxu0 0.0
    %1713 = vmatpush.msra.mxu0 0.0
    %1714 = vmatpush.msra.mxu0 0.0
    %1715 = vmatpush.msra.mxu0 0.0
    %1716 = vmatpush.msra.mxu0 0.0
    %1717 = vmatpush.msra.mxu0 %v1686
    %1718 = vmatmul.f32.gmra.mxu0 %v1700
    %v1719 = vpop.f32.mrf.mxu0
    %v1720 = vadd.f32 %v1696, %v1719
    %1721 = vdwg.mxu0
    %v1722 = vmax.f32 %v1720, 0.0
    %vm1723 = vcmask 254976
    %1724 = vst.msk [vmem:[#allocation5] sm:$0x3] %vm1723, %v1722
    // Predicated region
    $region34: #{_lambda_.1} parent=1 // pred_check
      _
    $region35: #{_lambda_.1} parent=1 // pred_check_branch
      %1726 = sbr.rel (0) target = $region37
    $region36: #{_lambda_.1} parent=1 // pred_region
      %1728 = vsyncadd [#allocation4], 0
      %s1730 = sshll.u32 [#allocation5], 4
      %s1731 = int_to_ptr.vmem [resolvable:$true] %s1730
      %s1732 = sshll.u32 %s7, 4
      %s1733 = int_to_ptr.hbm [resolvable:$true] %s1732
      %1735 = dma.vmem_to_hbm [thread:$0]  %s1731, 32, %s1733, [#allocation4]
    $region37: #{_lambda_.1} parent=1 // pred_fallthru
      _
    // Predicated region
    $region38: #{_lambda_.1} parent=1 // pred_check
      _
    $region39: #{_lambda_.1} parent=1 // pred_check_branch
      %1737 = sbr.rel (0) target = $region41
    $region40: #{_lambda_.1} parent=1 // pred_region
      %1739 = dma.done [#allocation4], 32
    $region41: #{_lambda_.1} parent=1 // pred_fallthru
      _
    %1740 = vsyncpa [#allocation3], 1
    %1741 = vsyncpa [#allocation4], 1

</llo_original>
